<compile_context>
chip_gen: v7x
topology: tpu7x:2x2x1
jax: 0.10.0
libtpu: 0.0.40
codegen_flags: <defaults>
</compile_context>

<pallas_src>
import functools

import jax
import jax.numpy as jnp
from jax import lax
from jax.experimental import pallas as pl
from jax.experimental.pallas import tpu as pltpu


def _attention_pooling_kernel(x_ref, w1t_ref, b1_ref, w2row_ref, mask_ref,
                              b2_ref, o_ref, *, approx_recip, matmul_precision):
    # x_ref:     (TB, S, H)  TB batch rows of the input (stream dtype)
    # w1t_ref:   (H, H)      att_fc1.weight, pre-transposed (x @ w1t == x @ W1^T)
    # b1_ref:    (1, H)      att_fc1.bias (f32)
    # w2row_ref: (1, H)      att_fc2.weight as a lane-dense row (f32)
    # mask_ref:  (TB, S)     attention mask, S on the lane axis
    # b2_ref:    (1,)        att_fc2.bias, SMEM scalar (f32)
    # o_ref:     (TB, H)     pooled output (lane-dense store)
    TB, S, H = x_ref.shape
    x = x_ref[...]                                                  # (TB, S, H)

    # ---- att_fc1 + tanh: one MXU matmul over all TB*S rows -------------------
    xf = x.reshape(TB * S, H)
    e = jnp.tanh(
        jnp.dot(xf, w1t_ref[...], preferred_element_type=jnp.float32,
                precision=matmul_precision)
        + b1_ref[...]
    )                                                               # (TB*S, H) f32

    # ---- att_fc2 (output width 1): VPU multiply + lane reduction -------------
    logits = jnp.sum((e * w2row_ref[...]).reshape(TB, S, H), axis=-1) \
        + b2_ref[0]                                                 # (TB, S)

    # ---- masked, normalized attention weights (lane-dense (TB, S)) -----------
    logits = logits - jnp.max(logits, axis=-1, keepdims=True)       # stabilize exp
    alpha = jnp.exp(logits) * mask_ref[...].astype(jnp.float32)     # (TB, S)
    denom = jnp.sum(alpha, axis=-1, keepdims=True) + 1e-8           # (TB, 1)
    if approx_recip:
        alpha = alpha * pl.reciprocal(denom, approx=True)           # EUP slot
    else:
        alpha = alpha / denom

    # ---- weighted sum over S on the (otherwise idle) MXU ---------------------
    #   (TB, 1, S) @ (TB, S, H) -> (TB, 1, H), batched matmul, f32 accumulation.
    alpha3 = alpha.astype(x.dtype).reshape(TB, 1, S)
    pooled = jnp.einsum("bqs,bsh->bqh", alpha3, x,
                        preferred_element_type=jnp.float32,
                        precision=matmul_precision)                 # (TB, 1, H)
    o_ref[...] = pooled.reshape(TB, H).astype(o_ref.dtype)


def _choose_block_b(B, S, H, x_itemsize):
    # Target >= 512 flattened (TB*S) rows so the fc1 matmul fills a 256-wide
    # MXU and the x DMA tiles are large enough to approach the HBM roofline.
    tb = max(8, pl.cdiv(512, S))
    tb = pl.cdiv(tb, 8) * 8                      # sublane-aligned blocks

    # Conservative per-step VMEM working-set budget (double-buffered tiles plus
    # f32 intermediates) that comfortably fits v7x's 64 MiB with compiler slack.
    budget = 24 * 1024 * 1024

    def workset(t):
        return (2 * t * S * H * x_itemsize       # x tile (double buffered)
                + 2 * t * S * H * 4              # e and e*w2 intermediates (f32)
                + 2 * t * S * 4                  # mask tile / alpha
                + 2 * t * H * 4)                 # output tile

    while tb > 8 and workset(tb) > budget:
        tb -= 8

    # Keep at least two grid steps when possible so dimension_semantics=
    # ("parallel",) can shard the batch across v7x's two TensorCores.
    if B > 8:
        tb = min(tb, pl.cdiv(pl.cdiv(B, 2), 8) * 8)
    return min(tb, B)


def attention_pooling(x, w1, b1, w2, b2, attn_mask=None, *, block_b=None,
                      precise=False):
    """x: (B,S,H); w1: (H,H); b1: (H,); w2: (1,H); b2: (1,); attn_mask: (B,S)|None.

    precise=False (default): bf16 HBM stream + bf16 MXU operands (f32 accum),
    approximate EUP reciprocal.  precise=True: operands kept in x.dtype,
    Precision.HIGHEST matmuls, exact divide (for parity tests).
    """
    B, S, H = x.shape
    out_dtype = x.dtype
    if attn_mask is None:
        attn_mask = jnp.ones((B, S), dtype=jnp.float32)

    stream_dtype = x.dtype if precise else jnp.bfloat16
    matmul_precision = lax.Precision.HIGHEST if precise else lax.Precision.DEFAULT

    # In a real model the upstream layer would already emit bf16; here the cast
    # is a cheap wrapper-side op that halves the kernel's HBM read bytes for x.
    xs = x.astype(stream_dtype)
    mask_s = attn_mask.astype(stream_dtype)
    w1t = w1.T.astype(stream_dtype)                    # (H, H)
    b1r = b1.reshape(1, H).astype(jnp.float32)         # (1, H)
    w2row = w2.reshape(1, H).astype(jnp.float32)       # (1, H)
    b2s = b2.reshape(1).astype(jnp.float32)            # (1,) -> SMEM scalar

    if block_b is None:
        TB = _choose_block_b(B, S, H, jnp.dtype(stream_dtype).itemsize)
    else:
        TB = min(pl.cdiv(max(8, int(block_b)), 8) * 8, B)
    grid = (pl.cdiv(B, TB),)   # ragged last block: no HBM padding pass needed

    kernel = functools.partial(_attention_pooling_kernel,
                               approx_recip=not precise,
                               matmul_precision=matmul_precision)

    out = pl.pallas_call(
        kernel,
        out_shape=jax.ShapeDtypeStruct((B, H), out_dtype),
        grid_spec=pltpu.PrefetchScalarGridSpec(
            num_scalar_prefetch=0,
            grid=grid,
            in_specs=[
                pl.BlockSpec((TB, S, H), lambda i: (i, 0, 0)),       # x
                pl.BlockSpec((H, H), lambda i: (0, 0)),              # W1^T (resident)
                pl.BlockSpec((1, H), lambda i: (0, 0)),              # b1
                pl.BlockSpec((1, H), lambda i: (0, 0)),              # w2 row
                pl.BlockSpec((TB, S), lambda i: (i, 0)),             # mask (lane-dense)
                pl.BlockSpec(memory_space=pltpu.MemorySpace.SMEM),   # b2 scalar
            ],
            out_specs=pl.BlockSpec((TB, H), lambda i: (i, 0)),       # (B, H) slab
        ),
        compiler_params=pltpu.CompilerParams(
            dimension_semantics=("parallel",),
            vmem_limit_bytes=48 * 1024 * 1024,
        ),
    )(xs, w1t, b1r, w2row, mask_s, b2s)

    return out


def _reference(x, w1, b1, w2, b2, attn_mask=None):
    hp = lax.Precision.HIGHEST
    e = jnp.tanh(jnp.einsum("bsh,kh->bsk", x, w1, precision=hp) + b1)
    alpha = jnp.exp(jnp.einsum("bsh,kh->bsk", e, w2, precision=hp) + b2)  # (B,S,1)
    if attn_mask is not None:
        alpha = alpha * attn_mask[:, :, None]
    alpha = alpha / (jnp.sum(alpha, axis=1, keepdims=True) + 1e-8)
    return jnp.einsum("bsh,bsk->bh", x, alpha, precision=hp)


if __name__ == "__main__":
    key = jax.random.PRNGKey(0)
    initializer_range = 0.02
    B, S, H = 2, 8, 32

    kx, kw1, kw2, kx2 = jax.random.split(key, 4)
    x = jax.random.normal(kx, (B, S, H), dtype=jnp.float32)

    # Deterministic parameter init matching the module's init_weights:
    # Linear weights ~ N(0, 0.02), biases zero.
    w1 = initializer_range * jax.random.normal(kw1, (H, H), dtype=jnp.float32)
    b1 = jnp.zeros((H,), dtype=jnp.float32)
    w2 = initializer_range * jax.random.normal(kw2, (1, H), dtype=jnp.float32)
    b2 = jnp.zeros((1,), dtype=jnp.float32)

    # Mask with some padded (zeroed) sequence positions.
    attn_mask = jnp.concatenate(
        [jnp.ones((B, S - 2), jnp.float32), jnp.zeros((B, 2), jnp.float32)], axis=1
    )
    ref = _reference(x, w1, b1, w2, b2, attn_mask)

    # --- test 1a: precise mode (f32 operands, HIGHEST matmuls, exact divide) ---
    out_p = attention_pooling(x, w1, b1, w2, b2, attn_mask, precise=True)
    out_p = jax.block_until_ready(out_p)
    assert out_p.shape == (B, H) and out_p.dtype == x.dtype
    assert jnp.allclose(out_p, ref, atol=1e-4, rtol=1e-4), "precise-mode mismatch"

    # --- test 1b: default fast mode (bf16 stream/MXU + approx reciprocal) ------
    out_f = attention_pooling(x, w1, b1, w2, b2, attn_mask)
    out_f = jax.block_until_ready(out_f)
    assert out_f.shape == (B, H)
    assert jnp.allclose(out_f, ref, atol=5e-2, rtol=5e-2), "fast-mode mismatch"

    # --- test 2: larger batch -> multi-step parallel grid + ragged last block --
    B2 = 20
    x2 = jax.random.normal(kx2, (B2, S, H), dtype=jnp.float32)
    mask2 = jnp.concatenate(
        [jnp.ones((B2, S - 3), jnp.float32), jnp.zeros((B2, 3), jnp.float32)], axis=1
    )
    out2 = attention_pooling(x2, w1, b1, w2, b2, mask2)   # heuristic TB=16, grid=2
    out2 = jax.block_until_ready(out2)
    ref2 = _reference(x2, w1, b1, w2, b2, mask2)
    assert out2.shape == (B2, H)
    assert jnp.allclose(out2, ref2, atol=5e-2, rtol=5e-2), "ragged-batch mismatch"

    print("KERNEL_OK")
</pallas_src>

<mosaic_0001>
module attributes {stable_mosaic.version = 11 : i64} {
  func.func @_attention_pooling_kernel(%arg0: i32, %arg1: memref<2x8x32xf32, #tpu.memory_space<vmem>>, %arg2: memref<32x32xf32, #tpu.memory_space<vmem>>, %arg3: memref<1x32xf32, #tpu.memory_space<vmem>>, %arg4: memref<1x32xf32, #tpu.memory_space<vmem>>, %arg5: memref<2x8xf32, #tpu.memory_space<vmem>>, %arg6: memref<1xf32, #tpu.memory_space<smem>>, %arg7: memref<2x32xf32, #tpu.memory_space<vmem>>) attributes {dimension_semantics = [#tpu.dimension_semantics<parallel>], iteration_bounds = array<i64: 1>, scalar_prefetch = 0 : i64, scratch_operands = 0 : i64, tpu.core_type = #tpu.core_type<tc>, window_params = [{transform_indices = @transform_0, window_bounds = array<i64: 2, 8, 32>}, {pipeline_mode = #tpu.pipeline_mode<synchronous>, transform_indices = @transform_1, window_bounds = array<i64: 32, 32>}, {pipeline_mode = #tpu.pipeline_mode<synchronous>, transform_indices = @transform_2, window_bounds = array<i64: 1, 32>}, {pipeline_mode = #tpu.pipeline_mode<synchronous>, transform_indices = @transform_3, window_bounds = array<i64: 1, 32>}, {transform_indices = @transform_4, window_bounds = array<i64: 2, 8>}, {transform_indices = @transform_5, window_bounds = array<i64: 1>}, {transform_indices = @transform_6, window_bounds = array<i64: 2, 32>}]} {
    %c0 = arith.constant 0 : index
    %c0_0 = arith.constant 0 : index
    %c0_1 = arith.constant 0 : index
    %0 = vector.load %arg1[%c0, %c0_0, %c0_1] : memref<2x8x32xf32, #tpu.memory_space<vmem>>, vector<2x8x32xf32>
    %1 = vector.shape_cast %0 : vector<2x8x32xf32> to vector<16x32xf32>
    %c0_2 = arith.constant 0 : index
    %c0_3 = arith.constant 0 : index
    %2 = vector.load %arg2[%c0_2, %c0_3] : memref<32x32xf32, #tpu.memory_space<vmem>>, vector<32x32xf32>
    %cst = arith.constant dense<0.000000e+00> : vector<16x32xf32>
    %3 = tpu.matmul %1, %2, %cst {dimension_numbers = #tpu.dot_dimension_numbers<[1], [0], [0], [1], [0, 0, 1, 1], [], []>, precision = #tpu.contract_precision<fp32>} : vector<16x32xf32>, vector<32x32xf32>, vector<16x32xf32> -> vector<16x32xf32>
    %c0_4 = arith.constant 0 : index
    %c0_5 = arith.constant 0 : index
    %4 = vector.load %arg3[%c0_4, %c0_5] : memref<1x32xf32, #tpu.memory_space<vmem>>, vector<1x32xf32>
    %5 = vector.broadcast %4 : vector<1x32xf32> to vector<16x32xf32>
    %6 = arith.addf %3, %5 : vector<16x32xf32>
    %7 = math.tanh %6 : vector<16x32xf32>
    %c0_6 = arith.constant 0 : index
    %c0_7 = arith.constant 0 : index
    %8 = vector.load %arg4[%c0_6, %c0_7] : memref<1x32xf32, #tpu.memory_space<vmem>>, vector<1x32xf32>
    %9 = vector.broadcast %8 : vector<1x32xf32> to vector<16x32xf32>
    %10 = arith.mulf %7, %9 : vector<16x32xf32>
    %11 = vector.shape_cast %10 : vector<16x32xf32> to vector<2x8x32xf32>
    %cst_8 = arith.constant dense<0.000000e+00> : vector<2x8xf32>
    %12 = vector.multi_reduction <add>, %11, %cst_8 [2] : vector<2x8x32xf32> to vector<2x8xf32>
    %c0_9 = arith.constant 0 : index
    %13 = memref.load %arg6[%c0_9] : memref<1xf32, #tpu.memory_space<smem>>
    %14 = vector.broadcast %13 : f32 to vector<2x8xf32>
    %15 = arith.addf %12, %14 : vector<2x8xf32>
    %cst_10 = arith.constant dense<0xFF800000> : vector<2xf32>
    %16 = vector.multi_reduction <maximumf>, %15, %cst_10 [1] : vector<2x8xf32> to vector<2xf32>
    %17 = vector.shape_cast %16 : vector<2xf32> to vector<2x1xf32>
    %18 = vector.broadcast %17 : vector<2x1xf32> to vector<2x8xf32>
    %19 = arith.subf %15, %18 : vector<2x8xf32>
    %20 = math.exp %19 : vector<2x8xf32>
    %c0_11 = arith.constant 0 : index
    %c0_12 = arith.constant 0 : index
    %21 = vector.load %arg5[%c0_11, %c0_12] : memref<2x8xf32, #tpu.memory_space<vmem>>, vector<2x8xf32>
    %22 = arith.mulf %20, %21 : vector<2x8xf32>
    %cst_13 = arith.constant dense<0.000000e+00> : vector<2xf32>
    %23 = vector.multi_reduction <add>, %22, %cst_13 [1] : vector<2x8xf32> to vector<2xf32>
    %24 = vector.shape_cast %23 : vector<2xf32> to vector<2x1xf32>
    %cst_14 = arith.constant 9.99999993E-9 : f32
    %25 = vector.broadcast %cst_14 : f32 to vector<2x1xf32>
    %26 = arith.addf %24, %25 : vector<2x1xf32>
    %27 = vector.broadcast %26 : vector<2x1xf32> to vector<2x8xf32>
    %28 = arith.divf %22, %27 : vector<2x8xf32>
    %29 = vector.shape_cast %28 : vector<2x8xf32> to vector<2x1x8xf32>
    "tpu.trace_start"() <{level = 10 : i32, message = "bqs,bsh->bqh"}> : () -> ()
    %cst_15 = arith.constant dense<0.000000e+00> : vector<2x1x32xf32>
    %30 = tpu.matmul %29, %0, %cst_15 {dimension_numbers = #tpu.dot_dimension_numbers<[2], [1], [1], [2], [0, 0, 0, 1, 1, 2], [0], [0]>, precision = #tpu.contract_precision<fp32>} : vector<2x1x8xf32>, vector<2x8x32xf32>, vector<2x1x32xf32> -> vector<2x1x32xf32>
    "tpu.trace_stop"() : () -> ()
    %31 = vector.shape_cast %30 : vector<2x1x32xf32> to vector<2x32xf32>
    %c0_16 = arith.constant 0 : index
    %c0_17 = arith.constant 0 : index
    %32 = vector.load %arg7[%c0_16, %c0_17] : memref<2x32xf32, #tpu.memory_space<vmem>>, vector<2x32xf32>
    tpu.vector_store %arg7[%c0_16, %c0_17], %31 {strides = array<i32>} : memref<2x32xf32, #tpu.memory_space<vmem>>, vector<2x32xf32>,
    return
  }
  func.func @transform_0(%arg0: i32) -> (i32, i32, i32) {
    %c0_i32 = arith.constant 0 : i32
    %c0_i32_0 = arith.constant 0 : i32
    %c0_i32_1 = arith.constant 0 : i32
    return %arg0, %c0_i32, %c0_i32_0 : i32, i32, i32
  }
  func.func @transform_1(%arg0: i32) -> (i32, i32) {
    %c0_i32 = arith.constant 0 : i32
    %c0_i32_0 = arith.constant 0 : i32
    %c0_i32_1 = arith.constant 0 : i32
    return %c0_i32, %c0_i32_0 : i32, i32
  }
  func.func @transform_2(%arg0: i32) -> (i32, i32) {
    %c0_i32 = arith.constant 0 : i32
    %c0_i32_0 = arith.constant 0 : i32
    %c0_i32_1 = arith.constant 0 : i32
    return %c0_i32, %c0_i32_0 : i32, i32
  }
  func.func @transform_3(%arg0: i32) -> (i32, i32) {
    %c0_i32 = arith.constant 0 : i32
    %c0_i32_0 = arith.constant 0 : i32
    %c0_i32_1 = arith.constant 0 : i32
    return %c0_i32, %c0_i32_0 : i32, i32
  }
  func.func @transform_4(%arg0: i32) -> (i32, i32) {
    %c0_i32 = arith.constant 0 : i32
    %c0_i32_0 = arith.constant 0 : i32
    return %arg0, %c0_i32 : i32, i32
  }
  func.func @transform_5(%arg0: i32) -> i32 {
    %c0_i32 = arith.constant 0 : i32
    %c0_i32_0 = arith.constant 0 : i32
    return %c0_i32 : i32
  }
  func.func @transform_6(%arg0: i32) -> (i32, i32) {
    %c0_i32 = arith.constant 0 : i32
    %c0_i32_0 = arith.constant 0 : i32
    return %arg0, %c0_i32 : i32, i32
  }
}

</mosaic_0001>

<llo_original>
// kernel: tpu_custom_call.1
$region0: #{tpu_custom_call.1}
  #allocation0 [shape = 'u32[]', space=smem, size = 0x4, offset = 0x4, fixed_abs, tag = 'smem constant byte address 0x4 - core index']
  #allocation1 [shape = 'u32[144,128]{1,0:T(1,128)}', space=vmem, size = 0x12000, scoped, tag = 'internal scratch']
  #allocation2 [shape = 'f32[1]{0:T(128)S(6)}', space=smem, size = 0x200, scoped, tag = 'scoped memory for tpu_custom_call.1']
  %s0 = inlined_call_operand.hbm [shape: f32[2,8,32], index: 0, kind: input, shape index: {}]
  %s1 = inlined_call_operand.hbm [shape: f32[32,32], index: 1, kind: input, shape index: {}]
  %s2 = inlined_call_operand.vmem [shape: f32[1,32], index: 2, kind: input, shape index: {}]
  %s3 = inlined_call_operand.vmem [shape: f32[1,32], index: 3, kind: input, shape index: {}]
  %s4 = inlined_call_operand.vmem [shape: f32[2,8], index: 4, kind: input, shape index: {}]
  %s5 = inlined_call_operand.<no memory space> [shape: f32[1], index: 5, kind: input, shape index: {}]
  %s6 = inlined_call_operand.hbm [shape: f32[2,32], index: 6, kind: output, shape index: {}]
  %s7 = sld [smem:[#allocation0]]
  $region42: #{tpu_custom_call.1} parent=0
    _
  %s9 = ssub.s32 1, %s7
  %s10 = scalar_select 0, %s9, %s7
  %11 = sst [smem:[#allocation2]] %s5
  $region1: #{tpu_custom_call.1} parent=0
    #allocation3 [shape = 'u8[8192]{0}', space=vmem, size = 0x2000, scoped, tag = 'input window, operand 0, single buffered']
    #allocation4 [shape = 's32[1]{0}', space=sflag, size = 0x4, scoped, tag = 'scoped memory for tpu_custom_call.1']
    #allocation5 [shape = 's32[1]{0}', space=sflag, size = 0x4, scoped, tag = 'scoped memory for tpu_custom_call.1']
    #allocation6 [shape = 'u8[16384]{0}', space=vmem, size = 0x4000, scoped, tag = 'input window, operand 1, single buffered']
    #allocation7 [shape = 's32[1]{0}', space=sflag, size = 0x4, scoped, tag = 'scoped memory for tpu_custom_call.1']
    #allocation8 [shape = 'u8[1024]{0}', space=vmem, size = 0x400, scoped, tag = 'output window, operand 0, single buffered']
    %12 = vsyncpa [#allocation4], 0
    %13 = vsyncpa [#allocation7], 0
    %14 = vsyncpa [#allocation5], 0
    // Predicated region
    $region2: #{tpu_custom_call.1} parent=1 // pred_check
      _
    $region3: #{tpu_custom_call.1} parent=1 // pred_check_branch
      %16 = sbr.rel (0) target = $region5
    $region4: #{tpu_custom_call.1} parent=1 // pred_region
      %s18 = ssub.s32 256, 256
      %19 = vsyncadd [#allocation4], %s18
      %s20 = sshll.u32 [#allocation3], 4
      %s21 = int_to_ptr.vmem [resolvable:$true] %s20
      %26 = dma.hbm_to_vmem [thread:$0]  %s0, 256, %s21, [#allocation4], 128, 128, 8
    $region5: #{tpu_custom_call.1} parent=1 // pred_fallthru
      _
    // Predicated region
    $region6: #{tpu_custom_call.1} parent=1 // pred_check
      _
    $region7: #{tpu_custom_call.1} parent=1 // pred_check_branch
      %28 = sbr.rel (0) target = $region9
    $region8: #{tpu_custom_call.1} parent=1 // pred_region
      %s30 = ssub.s32 512, 512
      %31 = vsyncadd [#allocation7], %s30
      %s32 = sshll.u32 [#allocation6], 4
      %s33 = int_to_ptr.vmem [resolvable:$true] %s32
      %38 = dma.hbm_to_vmem [thread:$0]  %s1, 512, %s33, [#allocation7], 128, 128, 8
    $region9: #{tpu_custom_call.1} parent=1 // pred_fallthru
      _
    // Predicated region
    $region10: #{tpu_custom_call.1} parent=1 // pred_check
      _
    $region11: #{tpu_custom_call.1} parent=1 // pred_check_branch
      %40 = sbr.rel (0) target = $region13
    $region12: #{tpu_custom_call.1} parent=1 // pred_region
      _
    $region13: #{tpu_custom_call.1} parent=1 // pred_fallthru
      _
    // Predicated region
    $region14: #{tpu_custom_call.1} parent=1 // pred_check
      _
    $region15: #{tpu_custom_call.1} parent=1 // pred_check_branch
      %42 = sbr.rel (0) target = $region17
    $region16: #{tpu_custom_call.1} parent=1 // pred_region
      _
    $region17: #{tpu_custom_call.1} parent=1 // pred_fallthru
      _
    // Predicated region
    $region18: #{tpu_custom_call.1} parent=1 // pred_check
      _
    $region19: #{tpu_custom_call.1} parent=1 // pred_check_branch
      %44 = sbr.rel (0) target = $region21
    $region20: #{tpu_custom_call.1} parent=1 // pred_region
      _
    $region21: #{tpu_custom_call.1} parent=1 // pred_fallthru
      _
    // Predicated region
    $region22: #{tpu_custom_call.1} parent=1 // pred_check
      _
    $region23: #{tpu_custom_call.1} parent=1 // pred_check_branch
      %46 = sbr.rel (0) target = $region25
    $region24: #{tpu_custom_call.1} parent=1 // pred_region
      _
    $region25: #{tpu_custom_call.1} parent=1 // pred_fallthru
      _
    // Predicated region
    $region26: #{tpu_custom_call.1} parent=1 // pred_check
      _
    $region27: #{tpu_custom_call.1} parent=1 // pred_check_branch
      %48 = sbr.rel (0) target = $region29
    $region28: #{tpu_custom_call.1} parent=1 // pred_region
      %49 = dma.done [#allocation4], 256
    $region29: #{tpu_custom_call.1} parent=1 // pred_fallthru
      _
    // Predicated region
    $region30: #{tpu_custom_call.1} parent=1 // pred_check
      _
    $region31: #{tpu_custom_call.1} parent=1 // pred_check_branch
      %51 = sbr.rel (0) target = $region33
    $region32: #{tpu_custom_call.1} parent=1 // pred_region
      %52 = dma.done [#allocation7], 512
    $region33: #{tpu_custom_call.1} parent=1 // pred_fallthru
      _
    %v53 = vld [vmem:[#allocation3] sm:$0xff]
    %v54 = vld [vmem:[#allocation3 + $0x8] sm:$0xff]
    %v55 = vld [vmem:[#allocation6] sm:$0xff]
    %v56 = vld [vmem:[#allocation6 + $0x8] sm:$0xff]
    %v57 = vld [vmem:[#allocation6 + $0x10] sm:$0xff]
    %v58 = vld [vmem:[#allocation6 + $0x18] sm:$0xff]
    %v59 = vld [vmem:[%s2] sm:$0x1]
    %v61 = vlaneseq
    %v62 = vshrl.u32 %v61, 7
    %v63 = vsub.s32 0, %v62
    %v64 = vrot.slane %v59, %v63
    %vm66 = vcmask 261120
    %v68 = vsel %vm66, %v53, 0
    %v71 = vsel %vm66, %v54, 0
    %73 = vmatprep.subr.mxu0 0.0
    %v74 = vand.u32 %v55, 4294901760
    %75 = vmatpush1.msra.mxu0 %v74
    %76 = vmatprep.subr.mxu0 0.0
    %v77 = vand.u32 %v56, 4294901760
    %78 = vmatpush1.msra.mxu0 %v77
    %79 = vmatprep.subr.mxu0 0.0
    %v80 = vand.u32 %v57, 4294901760
    %81 = vmatpush1.msra.mxu0 %v80
    %82 = vmatprep.subr.mxu0 0.0
    %v83 = vand.u32 %v58, 4294901760
    %84 = vmatpush1.msra.mxu0 %v83
    %85 = vmatprep.subr.mxu0 0.0
    %86 = vmatpush1.msra.mxu0 0.0
    %87 = vmatprep.subr.mxu0 0.0
    %88 = vmatpush1.msra.mxu0 0.0
    %89 = vmatprep.subr.mxu0 0.0
    %90 = vmatpush1.msra.mxu0 0.0
    %91 = vmatprep.subr.mxu0 0.0
    %92 = vmatpush1.msra.mxu0 0.0
    %93 = vmatprep.subr.mxu0 0.0
    %94 = vmatpush1.msra.mxu0 0.0
    %95 = vmatprep.subr.mxu0 0.0
    %96 = vmatpush1.msra.mxu0 0.0
    %97 = vmatprep.subr.mxu0 0.0
    %98 = vmatpush1.msra.mxu0 0.0
    %99 = vmatprep.subr.mxu0 0.0
    %100 = vmatpush1.msra.mxu0 0.0
    %101 = vmatprep.subr.mxu0 0.0
    %102 = vmatpush1.msra.mxu0 0.0
    %103 = vmatprep.subr.mxu0 0.0
    %104 = vmatpush1.msra.mxu0 0.0
    %105 = vmatprep.subr.mxu0 0.0
    %106 = vmatpush1.msra.mxu0 0.0
    %107 = vmatprep.subr.mxu0 0.0
    %108 = vmatpush1.msra.mxu0 0.0
    %109 = vmatprep.subr.mxu0 0.0
    %110 = vmatpush1.msra.mxu0 0.0
    %111 = vmatprep.subr.mxu0 0.0
    %112 = vmatpush1.msra.mxu0 0.0
    %113 = vmatprep.subr.mxu0 0.0
    %114 = vmatpush1.msra.mxu0 0.0
    %115 = vmatprep.subr.mxu0 0.0
    %116 = vmatpush1.msra.mxu0 0.0
    %117 = vmatprep.subr.mxu0 0.0
    %118 = vmatpush1.msra.mxu0 0.0
    %119 = vmatprep.subr.mxu0 0.0
    %120 = vmatpush1.msra.mxu0 0.0
    %121 = vmatprep.subr.mxu0 0.0
    %122 = vmatpush1.msra.mxu0 0.0
    %123 = vmatprep.subr.mxu0 0.0
    %124 = vmatpush1.msra.mxu0 0.0
    %125 = vmatprep.subr.mxu0 0.0
    %126 = vmatpush1.msra.mxu0 0.0
    %127 = vmatprep.subr.mxu0 0.0
    %128 = vmatpush1.msra.mxu0 0.0
    %129 = vmatprep.subr.mxu0 0.0
    %130 = vmatpush1.msra.mxu0 0.0
    %131 = vmatprep.subr.mxu0 0.0
    %132 = vmatpush1.msra.mxu0 0.0
    %133 = vmatprep.subr.mxu0 0.0
    %134 = vmatpush1.msra.mxu0 0.0
    %135 = vmatprep.subr.mxu0 0.0
    %136 = vmatpush1.msra.mxu0 0.0
    %137 = vmatprep.subr.mxu0 0.0
    %138 = vmatpush1.msra.mxu0 0.0
    %139 = vmatprep.subr.mxu0 0.0
    %140 = vmatpush1.msra.mxu0 0.0
    %141 = vmatprep.mubr.f32.mxu0 0.0
    %v142 = vand.u32 %v68, 4294901760
    %v143 = vsub.f32 %v68, %v142
    %v144 = vand.u32 %v143, 4294901760
    %v145 = vsub.f32 %v143, %v144
    %v146 = vand.u32 %v145, 4294901760
    %147 = vmatmul.mubr.f32.gmra.mrb[0].mxu0 %v146
    %v148 = vpop.f32.mrb[0].mxu0
    %v149 = vadd.f32 %v64, %v148
    %v150 = vpop.f32.mrb[0].mxu0
    %151 = vmatprep.mubr.f32.mxu0 0.0
    %v152 = vand.u32 %v71, 4294901760
    %v153 = vsub.f32 %v71, %v152
    %v154 = vand.u32 %v153, 4294901760
    %v155 = vsub.f32 %v153, %v154
    %v156 = vand.u32 %v155, 4294901760
    %157 = vmatmul.mubr.f32.gmra.mrb[0].mxu0 %v156
    %v158 = vpop.f32.mrb[0].mxu0
    %v159 = vadd.f32 %v64, %v158
    %v160 = vpop.f32.mrb[0].mxu0
    %161 = vdwg.mxu0
    %162 = vmatprep.subr.mxu0 0.0
    %v163 = vand.u32 %v55, 4294901760
    %v164 = vsub.f32 %v55, %v163
    %v165 = vand.u32 %v164, 4294901760
    %v166 = vsub.f32 %v164, %v165
    %v167 = vand.u32 %v166, 4294901760
    %168 = vmatpush1.msra.mxu0 %v167
    %169 = vmatprep.subr.mxu0 0.0
    %v170 = vand.u32 %v56, 4294901760
    %v171 = vsub.f32 %v56, %v170
    %v172 = vand.u32 %v171, 4294901760
    %v173 = vsub.f32 %v171, %v172
    %v174 = vand.u32 %v173, 4294901760
    %175 = vmatpush1.msra.mxu0 %v174
    %176 = vmatprep.subr.mxu0 0.0
    %v177 = vand.u32 %v57, 4294901760
    %v178 = vsub.f32 %v57, %v177
    %v179 = vand.u32 %v178, 4294901760
    %v180 = vsub.f32 %v178, %v179
    %v181 = vand.u32 %v180, 4294901760
    %182 = vmatpush1.msra.mxu0 %v181
    %183 = vmatprep.subr.mxu0 0.0
    %v184 = vand.u32 %v58, 4294901760
    %v185 = vsub.f32 %v58, %v184
    %v186 = vand.u32 %v185, 4294901760
    %v187 = vsub.f32 %v185, %v186
    %v188 = vand.u32 %v187, 4294901760
    %189 = vmatpush1.msra.mxu0 %v188
    %190 = vmatprep.subr.mxu0 0.0
    %191 = vmatpush1.msra.mxu0 0.0
    %192 = vmatprep.subr.mxu0 0.0
    %193 = vmatpush1.msra.mxu0 0.0
    %194 = vmatprep.subr.mxu0 0.0
    %195 = vmatpush1.msra.mxu0 0.0
    %196 = vmatprep.subr.mxu0 0.0
    %197 = vmatpush1.msra.mxu0 0.0
    %198 = vmatprep.subr.mxu0 0.0
    %199 = vmatpush1.msra.mxu0 0.0
    %200 = vmatprep.subr.mxu0 0.0
    %201 = vmatpush1.msra.mxu0 0.0
    %202 = vmatprep.subr.mxu0 0.0
    %203 = vmatpush1.msra.mxu0 0.0
    %204 = vmatprep.subr.mxu0 0.0
    %205 = vmatpush1.msra.mxu0 0.0
    %206 = vmatprep.subr.mxu0 0.0
    %207 = vmatpush1.msra.mxu0 0.0
    %208 = vmatprep.subr.mxu0 0.0
    %209 = vmatpush1.msra.mxu0 0.0
    %210 = vmatprep.subr.mxu0 0.0
    %211 = vmatpush1.msra.mxu0 0.0
    %212 = vmatprep.subr.mxu0 0.0
    %213 = vmatpush1.msra.mxu0 0.0
    %214 = vmatprep.subr.mxu0 0.0
    %215 = vmatpush1.msra.mxu0 0.0
    %216 = vmatprep.subr.mxu0 0.0
    %217 = vmatpush1.msra.mxu0 0.0
    %218 = vmatprep.subr.mxu0 0.0
    %219 = vmatpush1.msra.mxu0 0.0
    %220 = vmatprep.subr.mxu0 0.0
    %221 = vmatpush1.msra.mxu0 0.0
    %222 = vmatprep.subr.mxu0 0.0
    %223 = vmatpush1.msra.mxu0 0.0
    %224 = vmatprep.subr.mxu0 0.0
    %225 = vmatpush1.msra.mxu0 0.0
    %226 = vmatprep.subr.mxu0 0.0
    %227 = vmatpush1.msra.mxu0 0.0
    %228 = vmatprep.subr.mxu0 0.0
    %229 = vmatpush1.msra.mxu0 0.0
    %230 = vmatprep.subr.mxu0 0.0
    %231 = vmatpush1.msra.mxu0 0.0
    %232 = vmatprep.subr.mxu0 0.0
    %233 = vmatpush1.msra.mxu0 0.0
    %234 = vmatprep.subr.mxu0 0.0
    %235 = vmatpush1.msra.mxu0 0.0
    %236 = vmatprep.subr.mxu0 0.0
    %237 = vmatpush1.msra.mxu0 0.0
    %238 = vmatprep.subr.mxu0 0.0
    %239 = vmatpush1.msra.mxu0 0.0
    %240 = vmatprep.subr.mxu0 0.0
    %241 = vmatpush1.msra.mxu0 0.0
    %242 = vmatprep.subr.mxu0 0.0
    %243 = vmatpush1.msra.mxu0 0.0
    %244 = vmatprep.subr.mxu0 0.0
    %245 = vmatpush1.msra.mxu0 0.0
    %246 = vmatprep.mubr.f32.mxu0 0.0
    %v247 = vand.u32 %v68, 4294901760
    %248 = vmatmul.mubr.f32.gmra.mrb[0].mxu0 %v247
    %v249 = vpop.f32.mrb[0].mxu0
    %v250 = vadd.f32 %v149, %v249
    %v251 = vpop.f32.mrb[0].mxu0
    %252 = vmatprep.mubr.f32.mxu0 0.0
    %v253 = vand.u32 %v71, 4294901760
    %254 = vmatmul.mubr.f32.gmra.mrb[0].mxu0 %v253
    %v255 = vpop.f32.mrb[0].mxu0
    %v256 = vadd.f32 %v159, %v255
    %v257 = vpop.f32.mrb[0].mxu0
    %258 = vdwg.mxu0
    %259 = vmatprep.subr.mxu0 0.0
    %v260 = vand.u32 %v55, 4294901760
    %v261 = vsub.f32 %v55, %v260
    %262 = vmatpush1.msra.mxu0 %v261
    %263 = vmatprep.subr.mxu0 0.0
    %v264 = vand.u32 %v56, 4294901760
    %v265 = vsub.f32 %v56, %v264
    %266 = vmatpush1.msra.mxu0 %v265
    %267 = vmatprep.subr.mxu0 0.0
    %v268 = vand.u32 %v57, 4294901760
    %v269 = vsub.f32 %v57, %v268
    %270 = vmatpush1.msra.mxu0 %v269
    %271 = vmatprep.subr.mxu0 0.0
    %v272 = vand.u32 %v58, 4294901760
    %v273 = vsub.f32 %v58, %v272
    %274 = vmatpush1.msra.mxu0 %v273
    %275 = vmatprep.subr.mxu0 0.0
    %276 = vmatpush1.msra.mxu0 0.0
    %277 = vmatprep.subr.mxu0 0.0
    %278 = vmatpush1.msra.mxu0 0.0
    %279 = vmatprep.subr.mxu0 0.0
    %280 = vmatpush1.msra.mxu0 0.0
    %281 = vmatprep.subr.mxu0 0.0
    %282 = vmatpush1.msra.mxu0 0.0
    %283 = vmatprep.subr.mxu0 0.0
    %284 = vmatpush1.msra.mxu0 0.0
    %285 = vmatprep.subr.mxu0 0.0
    %286 = vmatpush1.msra.mxu0 0.0
    %287 = vmatprep.subr.mxu0 0.0
    %288 = vmatpush1.msra.mxu0 0.0
    %289 = vmatprep.subr.mxu0 0.0
    %290 = vmatpush1.msra.mxu0 0.0
    %291 = vmatprep.subr.mxu0 0.0
    %292 = vmatpush1.msra.mxu0 0.0
    %293 = vmatprep.subr.mxu0 0.0
    %294 = vmatpush1.msra.mxu0 0.0
    %295 = vmatprep.subr.mxu0 0.0
    %296 = vmatpush1.msra.mxu0 0.0
    %297 = vmatprep.subr.mxu0 0.0
    %298 = vmatpush1.msra.mxu0 0.0
    %299 = vmatprep.subr.mxu0 0.0
    %300 = vmatpush1.msra.mxu0 0.0
    %301 = vmatprep.subr.mxu0 0.0
    %302 = vmatpush1.msra.mxu0 0.0
    %303 = vmatprep.subr.mxu0 0.0
    %304 = vmatpush1.msra.mxu0 0.0
    %305 = vmatprep.subr.mxu0 0.0
    %306 = vmatpush1.msra.mxu0 0.0
    %307 = vmatprep.subr.mxu0 0.0
    %308 = vmatpush1.msra.mxu0 0.0
    %309 = vmatprep.subr.mxu0 0.0
    %310 = vmatpush1.msra.mxu0 0.0
    %311 = vmatprep.subr.mxu0 0.0
    %312 = vmatpush1.msra.mxu0 0.0
    %313 = vmatprep.subr.mxu0 0.0
    %314 = vmatpush1.msra.mxu0 0.0
    %315 = vmatprep.subr.mxu0 0.0
    %316 = vmatpush1.msra.mxu0 0.0
    %317 = vmatprep.subr.mxu0 0.0
    %318 = vmatpush1.msra.mxu0 0.0
    %319 = vmatprep.subr.mxu0 0.0
    %320 = vmatpush1.msra.mxu0 0.0
    %321 = vmatprep.subr.mxu0 0.0
    %322 = vmatpush1.msra.mxu0 0.0
    %323 = vmatprep.subr.mxu0 0.0
    %324 = vmatpush1.msra.mxu0 0.0
    %325 = vmatprep.subr.mxu0 0.0
    %326 = vmatpush1.msra.mxu0 0.0
    %327 = vmatprep.subr.mxu0 0.0
    %328 = vmatpush1.msra.mxu0 0.0
    %329 = vmatprep.subr.mxu0 0.0
    %330 = vmatpush1.msra.mxu0 0.0
    %331 = vmatprep.mubr.f32.mxu0 0.0
    %v332 = vand.u32 %v68, 4294901760
    %v333 = vsub.f32 %v68, %v332
    %334 = vmatmul.mubr.f32.gmra.mrb[0].mxu0 %v333
    %v335 = vpop.f32.mrb[0].mxu0
    %v336 = vadd.f32 %v250, %v335
    %v337 = vpop.f32.mrb[0].mxu0
    %338 = vmatprep.mubr.f32.mxu0 0.0
    %v339 = vand.u32 %v71, 4294901760
    %v340 = vsub.f32 %v71, %v339
    %341 = vmatmul.mubr.f32.gmra.mrb[0].mxu0 %v340
    %v342 = vpop.f32.mrb[0].mxu0
    %v343 = vadd.f32 %v256, %v342
    %v344 = vpop.f32.mrb[0].mxu0
    %345 = vdwg.mxu0
    %346 = vmatprep.subr.mxu0 0.0
    %v347 = vand.u32 %v55, 4294901760
    %348 = vmatpush1.msra.mxu0 %v347
    %349 = vmatprep.subr.mxu0 0.0
    %v350 = vand.u32 %v56, 4294901760
    %351 = vmatpush1.msra.mxu0 %v350
    %352 = vmatprep.subr.mxu0 0.0
    %v353 = vand.u32 %v57, 4294901760
    %354 = vmatpush1.msra.mxu0 %v353
    %355 = vmatprep.subr.mxu0 0.0
    %v356 = vand.u32 %v58, 4294901760
    %357 = vmatpush1.msra.mxu0 %v356
    %358 = vmatprep.subr.mxu0 0.0
    %359 = vmatpush1.msra.mxu0 0.0
    %360 = vmatprep.subr.mxu0 0.0
    %361 = vmatpush1.msra.mxu0 0.0
    %362 = vmatprep.subr.mxu0 0.0
    %363 = vmatpush1.msra.mxu0 0.0
    %364 = vmatprep.subr.mxu0 0.0
    %365 = vmatpush1.msra.mxu0 0.0
    %366 = vmatprep.subr.mxu0 0.0
    %367 = vmatpush1.msra.mxu0 0.0
    %368 = vmatprep.subr.mxu0 0.0
    %369 = vmatpush1.msra.mxu0 0.0
    %370 = vmatprep.subr.mxu0 0.0
    %371 = vmatpush1.msra.mxu0 0.0
    %372 = vmatprep.subr.mxu0 0.0
    %373 = vmatpush1.msra.mxu0 0.0
    %374 = vmatprep.subr.mxu0 0.0
    %375 = vmatpush1.msra.mxu0 0.0
    %376 = vmatprep.subr.mxu0 0.0
    %377 = vmatpush1.msra.mxu0 0.0
    %378 = vmatprep.subr.mxu0 0.0
    %379 = vmatpush1.msra.mxu0 0.0
    %380 = vmatprep.subr.mxu0 0.0
    %381 = vmatpush1.msra.mxu0 0.0
    %382 = vmatprep.subr.mxu0 0.0
    %383 = vmatpush1.msra.mxu0 0.0
    %384 = vmatprep.subr.mxu0 0.0
    %385 = vmatpush1.msra.mxu0 0.0
    %386 = vmatprep.subr.mxu0 0.0
    %387 = vmatpush1.msra.mxu0 0.0
    %388 = vmatprep.subr.mxu0 0.0
    %389 = vmatpush1.msra.mxu0 0.0
    %390 = vmatprep.subr.mxu0 0.0
    %391 = vmatpush1.msra.mxu0 0.0
    %392 = vmatprep.subr.mxu0 0.0
    %393 = vmatpush1.msra.mxu0 0.0
    %394 = vmatprep.subr.mxu0 0.0
    %395 = vmatpush1.msra.mxu0 0.0
    %396 = vmatprep.subr.mxu0 0.0
    %397 = vmatpush1.msra.mxu0 0.0
    %398 = vmatprep.subr.mxu0 0.0
    %399 = vmatpush1.msra.mxu0 0.0
    %400 = vmatprep.subr.mxu0 0.0
    %401 = vmatpush1.msra.mxu0 0.0
    %402 = vmatprep.subr.mxu0 0.0
    %403 = vmatpush1.msra.mxu0 0.0
    %404 = vmatprep.subr.mxu0 0.0
    %405 = vmatpush1.msra.mxu0 0.0
    %406 = vmatprep.subr.mxu0 0.0
    %407 = vmatpush1.msra.mxu0 0.0
    %408 = vmatprep.subr.mxu0 0.0
    %409 = vmatpush1.msra.mxu0 0.0
    %410 = vmatprep.subr.mxu0 0.0
    %411 = vmatpush1.msra.mxu0 0.0
    %412 = vmatprep.subr.mxu0 0.0
    %413 = vmatpush1.msra.mxu0 0.0
    %414 = vmatprep.mubr.f32.mxu0 0.0
    %v415 = vand.u32 %v68, 4294901760
    %v416 = vsub.f32 %v68, %v415
    %v417 = vand.u32 %v416, 4294901760
    %418 = vmatmul.mubr.f32.gmra.mrb[0].mxu0 %v417
    %v419 = vpop.f32.mrb[0].mxu0
    %v420 = vadd.f32 %v336, %v419
    %v421 = vpop.f32.mrb[0].mxu0
    %422 = vmatprep.mubr.f32.mxu0 0.0
    %v423 = vand.u32 %v71, 4294901760
    %v424 = vsub.f32 %v71, %v423
    %v425 = vand.u32 %v424, 4294901760
    %426 = vmatmul.mubr.f32.gmra.mrb[0].mxu0 %v425
    %v427 = vpop.f32.mrb[0].mxu0
    %v428 = vadd.f32 %v343, %v427
    %v429 = vpop.f32.mrb[0].mxu0
    %430 = vdwg.mxu0
    %431 = vmatprep.subr.mxu0 0.0
    %v432 = vand.u32 %v55, 4294901760
    %v433 = vsub.f32 %v55, %v432
    %v434 = vand.u32 %v433, 4294901760
    %435 = vmatpush1.msra.mxu0 %v434
    %436 = vmatprep.subr.mxu0 0.0
    %v437 = vand.u32 %v56, 4294901760
    %v438 = vsub.f32 %v56, %v437
    %v439 = vand.u32 %v438, 4294901760
    %440 = vmatpush1.msra.mxu0 %v439
    %441 = vmatprep.subr.mxu0 0.0
    %v442 = vand.u32 %v57, 4294901760
    %v443 = vsub.f32 %v57, %v442
    %v444 = vand.u32 %v443, 4294901760
    %445 = vmatpush1.msra.mxu0 %v444
    %446 = vmatprep.subr.mxu0 0.0
    %v447 = vand.u32 %v58, 4294901760
    %v448 = vsub.f32 %v58, %v447
    %v449 = vand.u32 %v448, 4294901760
    %450 = vmatpush1.msra.mxu0 %v449
    %451 = vmatprep.subr.mxu0 0.0
    %452 = vmatpush1.msra.mxu0 0.0
    %453 = vmatprep.subr.mxu0 0.0
    %454 = vmatpush1.msra.mxu0 0.0
    %455 = vmatprep.subr.mxu0 0.0
    %456 = vmatpush1.msra.mxu0 0.0
    %457 = vmatprep.subr.mxu0 0.0
    %458 = vmatpush1.msra.mxu0 0.0
    %459 = vmatprep.subr.mxu0 0.0
    %460 = vmatpush1.msra.mxu0 0.0
    %461 = vmatprep.subr.mxu0 0.0
    %462 = vmatpush1.msra.mxu0 0.0
    %463 = vmatprep.subr.mxu0 0.0
    %464 = vmatpush1.msra.mxu0 0.0
    %465 = vmatprep.subr.mxu0 0.0
    %466 = vmatpush1.msra.mxu0 0.0
    %467 = vmatprep.subr.mxu0 0.0
    %468 = vmatpush1.msra.mxu0 0.0
    %469 = vmatprep.subr.mxu0 0.0
    %470 = vmatpush1.msra.mxu0 0.0
    %471 = vmatprep.subr.mxu0 0.0
    %472 = vmatpush1.msra.mxu0 0.0
    %473 = vmatprep.subr.mxu0 0.0
    %474 = vmatpush1.msra.mxu0 0.0
    %475 = vmatprep.subr.mxu0 0.0
    %476 = vmatpush1.msra.mxu0 0.0
    %477 = vmatprep.subr.mxu0 0.0
    %478 = vmatpush1.msra.mxu0 0.0
    %479 = vmatprep.subr.mxu0 0.0
    %480 = vmatpush1.msra.mxu0 0.0
    %481 = vmatprep.subr.mxu0 0.0
    %482 = vmatpush1.msra.mxu0 0.0
    %483 = vmatprep.subr.mxu0 0.0
    %484 = vmatpush1.msra.mxu0 0.0
    %485 = vmatprep.subr.mxu0 0.0
    %486 = vmatpush1.msra.mxu0 0.0
    %487 = vmatprep.subr.mxu0 0.0
    %488 = vmatpush1.msra.mxu0 0.0
    %489 = vmatprep.subr.mxu0 0.0
    %490 = vmatpush1.msra.mxu0 0.0
    %491 = vmatprep.subr.mxu0 0.0
    %492 = vmatpush1.msra.mxu0 0.0
    %493 = vmatprep.subr.mxu0 0.0
    %494 = vmatpush1.msra.mxu0 0.0
    %495 = vmatprep.subr.mxu0 0.0
    %496 = vmatpush1.msra.mxu0 0.0
    %497 = vmatprep.subr.mxu0 0.0
    %498 = vmatpush1.msra.mxu0 0.0
    %499 = vmatprep.subr.mxu0 0.0
    %500 = vmatpush1.msra.mxu0 0.0
    %501 = vmatprep.subr.mxu0 0.0
    %502 = vmatpush1.msra.mxu0 0.0
    %503 = vmatprep.subr.mxu0 0.0
    %504 = vmatpush1.msra.mxu0 0.0
    %505 = vmatprep.subr.mxu0 0.0
    %506 = vmatpush1.msra.mxu0 0.0
    %507 = vmatprep.mubr.f32.mxu0 0.0
    %v508 = vand.u32 %v68, 4294901760
    %509 = vmatmul.mubr.f32.gmra.mrb[0].mxu0 %v508
    %v510 = vpop.f32.mrb[0].mxu0
    %v511 = vadd.f32 %v420, %v510
    %v512 = vpop.f32.mrb[0].mxu0
    %513 = vmatprep.mubr.f32.mxu0 0.0
    %v514 = vand.u32 %v71, 4294901760
    %515 = vmatmul.mubr.f32.gmra.mrb[0].mxu0 %v514
    %v516 = vpop.f32.mrb[0].mxu0
    %v517 = vadd.f32 %v428, %v516
    %v518 = vpop.f32.mrb[0].mxu0
    %519 = vdwg.mxu0
    %520 = vmatprep.subr.mxu0 0.0
    %v521 = vand.u32 %v55, 4294901760
    %522 = vmatpush1.msra.mxu0 %v521
    %523 = vmatprep.subr.mxu0 0.0
    %v524 = vand.u32 %v56, 4294901760
    %525 = vmatpush1.msra.mxu0 %v524
    %526 = vmatprep.subr.mxu0 0.0
    %v527 = vand.u32 %v57, 4294901760
    %528 = vmatpush1.msra.mxu0 %v527
    %529 = vmatprep.subr.mxu0 0.0
    %v530 = vand.u32 %v58, 4294901760
    %531 = vmatpush1.msra.mxu0 %v530
    %532 = vmatprep.subr.mxu0 0.0
    %533 = vmatpush1.msra.mxu0 0.0
    %534 = vmatprep.subr.mxu0 0.0
    %535 = vmatpush1.msra.mxu0 0.0
    %536 = vmatprep.subr.mxu0 0.0
    %537 = vmatpush1.msra.mxu0 0.0
    %538 = vmatprep.subr.mxu0 0.0
    %539 = vmatpush1.msra.mxu0 0.0
    %540 = vmatprep.subr.mxu0 0.0
    %541 = vmatpush1.msra.mxu0 0.0
    %542 = vmatprep.subr.mxu0 0.0
    %543 = vmatpush1.msra.mxu0 0.0
    %544 = vmatprep.subr.mxu0 0.0
    %545 = vmatpush1.msra.mxu0 0.0
    %546 = vmatprep.subr.mxu0 0.0
    %547 = vmatpush1.msra.mxu0 0.0
    %548 = vmatprep.subr.mxu0 0.0
    %549 = vmatpush1.msra.mxu0 0.0
    %550 = vmatprep.subr.mxu0 0.0
    %551 = vmatpush1.msra.mxu0 0.0
    %552 = vmatprep.subr.mxu0 0.0
    %553 = vmatpush1.msra.mxu0 0.0
    %554 = vmatprep.subr.mxu0 0.0
    %555 = vmatpush1.msra.mxu0 0.0
    %556 = vmatprep.subr.mxu0 0.0
    %557 = vmatpush1.msra.mxu0 0.0
    %558 = vmatprep.subr.mxu0 0.0
    %559 = vmatpush1.msra.mxu0 0.0
    %560 = vmatprep.subr.mxu0 0.0
    %561 = vmatpush1.msra.mxu0 0.0
    %562 = vmatprep.subr.mxu0 0.0
    %563 = vmatpush1.msra.mxu0 0.0
    %564 = vmatprep.subr.mxu0 0.0
    %565 = vmatpush1.msra.mxu0 0.0
    %566 = vmatprep.subr.mxu0 0.0
    %567 = vmatpush1.msra.mxu0 0.0
    %568 = vmatprep.subr.mxu0 0.0
    %569 = vmatpush1.msra.mxu0 0.0
    %570 = vmatprep.subr.mxu0 0.0
    %571 = vmatpush1.msra.mxu0 0.0
    %572 = vmatprep.subr.mxu0 0.0
    %573 = vmatpush1.msra.mxu0 0.0
    %574 = vmatprep.subr.mxu0 0.0
    %575 = vmatpush1.msra.mxu0 0.0
    %576 = vmatprep.subr.mxu0 0.0
    %577 = vmatpush1.msra.mxu0 0.0
    %578 = vmatprep.subr.mxu0 0.0
    %579 = vmatpush1.msra.mxu0 0.0
    %580 = vmatprep.subr.mxu0 0.0
    %581 = vmatpush1.msra.mxu0 0.0
    %582 = vmatprep.subr.mxu0 0.0
    %583 = vmatpush1.msra.mxu0 0.0
    %584 = vmatprep.subr.mxu0 0.0
    %585 = vmatpush1.msra.mxu0 0.0
    %586 = vmatprep.subr.mxu0 0.0
    %587 = vmatpush1.msra.mxu0 0.0
    %588 = vmatprep.mubr.f32.mxu0 0.0
    %v589 = vand.u32 %v68, 4294901760
    %590 = vmatmul.mubr.f32.gmra.mrb[0].mxu0 %v589
    %v591 = vpop.f32.mrb[0].mxu0
    %v592 = vadd.f32 %v511, %v591
    %v593 = vpop.f32.mrb[0].mxu0
    %594 = vmatprep.mubr.f32.mxu0 0.0
    %v595 = vand.u32 %v71, 4294901760
    %596 = vmatmul.mubr.f32.gmra.mrb[0].mxu0 %v595
    %v597 = vpop.f32.mrb[0].mxu0
    %v598 = vadd.f32 %v517, %v597
    %v599 = vpop.f32.mrb[0].mxu0
    %600 = vdwg.mxu0
    %v601 = vtanh.pop %v592
    %v602 = vtanh.pop %v598
    %v603 = vld [vmem:[%s3] sm:$0x1]
    %v605 = vlaneseq
    %v606 = vshrl.u32 %v605, 7
    %v607 = vsub.s32 0, %v606
    %v608 = vrot.slane %v603, %v607
    %v610 = vmul.f32 %v601, %v608
    %v611 = vmul.f32 %v602, %v608
    %v612 = vsel %vm66, %v610, 0.0
    %613 = vadd.xlane.f32.xlu0 %v612
    %v614 = vpop.xlane.xlu0 %613
    %v615 = vsel %vm66, %v611, 0.0
    %616 = vadd.xlane.f32.xlu0 %v615
    %v617 = vpop.xlane.xlu0 %616
    %s618 = sld [smem:[#allocation2]]
    %v619 = vstv %s618
    %v620 = vadd.f32 %v614, %v619
    %v621 = vadd.f32 %v617, %v619
    %v624 = vlaneseq
    %v625 = vand.u32 %v624, 127
    %v626 = vlaneseq
    %v627 = vshrl.u32 %v626, 7
    %v628 = vsub.s32 %v625, %v627
    %v629 = vrot.slane %v620, %v628
    %v630 = vlaneseq
    %v631 = vshrl.u32 %v630, 7
    %v632 = vsub.s32 %v625, %v631
    %v633 = vrot.slane %v621, %v632
    %vm634 = vcmask 1041409
    %v635 = vsel %vm634, %v633, %v629
    %vm637 = vcmask 58368
    %v638 = vsel %vm637, %v635, -inf
    %639 = vmax.xlane.f32.xlu0 %v638
    %v640 = vpop.xlane.xlu0 %639
    %v642 = vlaneseq
    %v643 = vshrl.u32 %v642, 7
    %v644 = vsub.s32 0, %v643
    %v645 = vrot.slane %v640, %v644
    %v646 = vlaneseq
    %v647 = vshrl.u32 %v646, 7
    %v648 = vsub.s32 1, %v647
    %v649 = vrot.slane %v640, %v648
    %v652 = vsub.f32 %v620, %v645
    %v653 = vsub.f32 %v621, %v649
    %v654 = vmul.f32 %v652, 1.442695
    %v655 = vpow.pop %v654
    %v656 = vmul.f32 %v653, 1.442695
    %v657 = vpow.pop %v656
    %v658 = vld [vmem:[%s4] sm:$0x3]
    %v660 = vlaneseq
    %v661 = vshrl.u32 %v660, 7
    %v662 = vsub.s32 0, %v661
    %v663 = vrot.slane %v658, %v662
    %665 = vbcast.lane.b32.xlu0 %v663, 256
    %v666 = vpop.permute.xlu0 %665
    %v667 = vlaneseq
    %v668 = vshrl.u32 %v667, 7
    %v669 = vsub.s32 1, %v668
    %v670 = vrot.slane %v658, %v669
    %672 = vbcast.lane.b32.xlu0 %v670, 256
    %v673 = vpop.permute.xlu0 %672
    %v676 = vmul.f32 %v655, %v666
    %v677 = vmul.f32 %v657, %v673
    %680 = vset.pattern.permute.xlu0 0
    %681 = vperm.xlu0 %680, %v676
    %v682 = vpop.permute.xlu0 %681
    %683 = vset.pattern.permute.xlu0 0
    %684 = vperm.xlu0 %683, %v677
    %v685 = vpop.permute.xlu0 %684
    %v686 = vlaneseq
    %v687 = vshrl.u32 %v686, 7
    %v688 = vsub.s32 %v625, %v687
    %v689 = vrot.slane %v682, %v688
    %v690 = vlaneseq
    %v691 = vshrl.u32 %v690, 7
    %v692 = vsub.s32 %v625, %v691
    %v693 = vrot.slane %v685, %v692
    %v694 = vsel %vm634, %v693, %v689
    %v696 = vsel %vm637, %v694, 0.0
    %697 = vadd.xlane.f32.xlu0 %v696
    %v698 = vpop.xlane.xlu0 %697
    %v699 = vadd.f32 %v698, 1e-08
    %v701 = vlaneseq
    %v702 = vshrl.u32 %v701, 7
    %v703 = vsub.s32 0, %v702
    %v704 = vrot.slane %v699, %v703
    %v705 = vlaneseq
    %v706 = vshrl.u32 %v705, 7
    %v707 = vsub.s32 1, %v706
    %v708 = vrot.slane %v699, %v707
    %v711 = vrcp.pop %v704
    %v712 = vmul.f32 %v676, %v711
    %v713 = vrcp.pop %v708
    %v714 = vmul.f32 %v677, %v713
    %716 = vset.pattern.permute.xlu0 0
    %717 = vperm.xlu0 %716, %v712
    %v718 = vpop.permute.xlu0 %717
    %v719 = vlaneseq
    %v720 = vshrl.u32 %v719, 7
    %v721 = vsub.s32 %v625, %v720
    %v722 = vrot.slane %v718, %v721
    %vm723 = vcmask 64512
    %v724 = vsel %vm723, %v722, 0
    %726 = vmatprep.subr.mxu0 0.0
    %v727 = vand.u32 %v53, 4294901760
    %728 = vmatpush1.msra.mxu0 %v727
    %729 = vmatprep.subr.mxu0 0.0
    %730 = vmatpush1.msra.mxu0 0.0
    %731 = vmatprep.subr.mxu0 0.0
    %732 = vmatpush1.msra.mxu0 0.0
    %733 = vmatprep.subr.mxu0 0.0
    %734 = vmatpush1.msra.mxu0 0.0
    %735 = vmatprep.subr.mxu0 0.0
    %736 = vmatpush1.msra.mxu0 0.0
    %737 = vmatprep.subr.mxu0 0.0
    %738 = vmatpush1.msra.mxu0 0.0
    %739 = vmatprep.subr.mxu0 0.0
    %740 = vmatpush1.msra.mxu0 0.0
    %741 = vmatprep.subr.mxu0 0.0
    %742 = vmatpush1.msra.mxu0 0.0
    %743 = vmatprep.subr.mxu0 0.0
    %744 = vmatpush1.msra.mxu0 0.0
    %745 = vmatprep.subr.mxu0 0.0
    %746 = vmatpush1.msra.mxu0 0.0
    %747 = vmatprep.subr.mxu0 0.0
    %748 = vmatpush1.msra.mxu0 0.0
    %749 = vmatprep.subr.mxu0 0.0
    %750 = vmatpush1.msra.mxu0 0.0
    %751 = vmatprep.subr.mxu0 0.0
    %752 = vmatpush1.msra.mxu0 0.0
    %753 = vmatprep.subr.mxu0 0.0
    %754 = vmatpush1.msra.mxu0 0.0
    %755 = vmatprep.subr.mxu0 0.0
    %756 = vmatpush1.msra.mxu0 0.0
    %757 = vmatprep.subr.mxu0 0.0
    %758 = vmatpush1.msra.mxu0 0.0
    %759 = vmatprep.subr.mxu0 0.0
    %760 = vmatpush1.msra.mxu0 0.0
    %761 = vmatprep.subr.mxu0 0.0
    %762 = vmatpush1.msra.mxu0 0.0
    %763 = vmatprep.subr.mxu0 0.0
    %764 = vmatpush1.msra.mxu0 0.0
    %765 = vmatprep.subr.mxu0 0.0
    %766 = vmatpush1.msra.mxu0 0.0
    %767 = vmatprep.subr.mxu0 0.0
    %768 = vmatpush1.msra.mxu0 0.0
    %769 = vmatprep.subr.mxu0 0.0
    %770 = vmatpush1.msra.mxu0 0.0
    %771 = vmatprep.subr.mxu0 0.0
    %772 = vmatpush1.msra.mxu0 0.0
    %773 = vmatprep.subr.mxu0 0.0
    %774 = vmatpush1.msra.mxu0 0.0
    %775 = vmatprep.subr.mxu0 0.0
    %776 = vmatpush1.msra.mxu0 0.0
    %777 = vmatprep.subr.mxu0 0.0
    %778 = vmatpush1.msra.mxu0 0.0
    %779 = vmatprep.subr.mxu0 0.0
    %780 = vmatpush1.msra.mxu0 0.0
    %781 = vmatprep.subr.mxu0 0.0
    %782 = vmatpush1.msra.mxu0 0.0
    %783 = vmatprep.subr.mxu0 0.0
    %784 = vmatpush1.msra.mxu0 0.0
    %785 = vmatprep.subr.mxu0 0.0
    %786 = vmatpush1.msra.mxu0 0.0
    %787 = vmatprep.subr.mxu0 0.0
    %788 = vmatpush1.msra.mxu0 0.0
    %789 = vmatprep.subr.mxu0 0.0
    %790 = vmatpush1.msra.mxu0 0.0
    %791 = vmatprep.mubr.f32.mxu0 0.0
    %v792 = vand.u32 %v724, 4294901760
    %v793 = vsub.f32 %v724, %v792
    %v794 = vand.u32 %v793, 4294901760
    %v795 = vsub.f32 %v793, %v794
    %v796 = vand.u32 %v795, 4294901760
    %797 = vmatmul.mubr.f32.gmra.mrb[0].mxu0 %v796
    %v798 = vpop.f32.mrb[0].mxu0
    %v799 = vadd.f32 0.0, %v798
    %v800 = vpop.f32.mrb[0].mxu0
    %801 = vdwg.mxu0
    %802 = vmatprep.subr.mxu0 0.0
    %v803 = vand.u32 %v53, 4294901760
    %v804 = vsub.f32 %v53, %v803
    %v805 = vand.u32 %v804, 4294901760
    %v806 = vsub.f32 %v804, %v805
    %v807 = vand.u32 %v806, 4294901760
    %808 = vmatpush1.msra.mxu0 %v807
    %809 = vmatprep.subr.mxu0 0.0
    %810 = vmatpush1.msra.mxu0 0.0
    %811 = vmatprep.subr.mxu0 0.0
    %812 = vmatpush1.msra.mxu0 0.0
    %813 = vmatprep.subr.mxu0 0.0
    %814 = vmatpush1.msra.mxu0 0.0
    %815 = vmatprep.subr.mxu0 0.0
    %816 = vmatpush1.msra.mxu0 0.0
    %817 = vmatprep.subr.mxu0 0.0
    %818 = vmatpush1.msra.mxu0 0.0
    %819 = vmatprep.subr.mxu0 0.0
    %820 = vmatpush1.msra.mxu0 0.0
    %821 = vmatprep.subr.mxu0 0.0
    %822 = vmatpush1.msra.mxu0 0.0
    %823 = vmatprep.subr.mxu0 0.0
    %824 = vmatpush1.msra.mxu0 0.0
    %825 = vmatprep.subr.mxu0 0.0
    %826 = vmatpush1.msra.mxu0 0.0
    %827 = vmatprep.subr.mxu0 0.0
    %828 = vmatpush1.msra.mxu0 0.0
    %829 = vmatprep.subr.mxu0 0.0
    %830 = vmatpush1.msra.mxu0 0.0
    %831 = vmatprep.subr.mxu0 0.0
    %832 = vmatpush1.msra.mxu0 0.0
    %833 = vmatprep.subr.mxu0 0.0
    %834 = vmatpush1.msra.mxu0 0.0
    %835 = vmatprep.subr.mxu0 0.0
    %836 = vmatpush1.msra.mxu0 0.0
    %837 = vmatprep.subr.mxu0 0.0
    %838 = vmatpush1.msra.mxu0 0.0
    %839 = vmatprep.subr.mxu0 0.0
    %840 = vmatpush1.msra.mxu0 0.0
    %841 = vmatprep.subr.mxu0 0.0
    %842 = vmatpush1.msra.mxu0 0.0
    %843 = vmatprep.subr.mxu0 0.0
    %844 = vmatpush1.msra.mxu0 0.0
    %845 = vmatprep.subr.mxu0 0.0
    %846 = vmatpush1.msra.mxu0 0.0
    %847 = vmatprep.subr.mxu0 0.0
    %848 = vmatpush1.msra.mxu0 0.0
    %849 = vmatprep.subr.mxu0 0.0
    %850 = vmatpush1.msra.mxu0 0.0
    %851 = vmatprep.subr.mxu0 0.0
    %852 = vmatpush1.msra.mxu0 0.0
    %853 = vmatprep.subr.mxu0 0.0
    %854 = vmatpush1.msra.mxu0 0.0
    %855 = vmatprep.subr.mxu0 0.0
    %856 = vmatpush1.msra.mxu0 0.0
    %857 = vmatprep.subr.mxu0 0.0
    %858 = vmatpush1.msra.mxu0 0.0
    %859 = vmatprep.subr.mxu0 0.0
    %860 = vmatpush1.msra.mxu0 0.0
    %861 = vmatprep.subr.mxu0 0.0
    %862 = vmatpush1.msra.mxu0 0.0
    %863 = vmatprep.subr.mxu0 0.0
    %864 = vmatpush1.msra.mxu0 0.0
    %865 = vmatprep.subr.mxu0 0.0
    %866 = vmatpush1.msra.mxu0 0.0
    %867 = vmatprep.subr.mxu0 0.0
    %868 = vmatpush1.msra.mxu0 0.0
    %869 = vmatprep.subr.mxu0 0.0
    %870 = vmatpush1.msra.mxu0 0.0
    %871 = vmatprep.mubr.f32.mxu0 0.0
    %v872 = vand.u32 %v724, 4294901760
    %873 = vmatmul.mubr.f32.gmra.mrb[0].mxu0 %v872
    %v874 = vpop.f32.mrb[0].mxu0
    %v875 = vadd.f32 %v799, %v874
    %v876 = vpop.f32.mrb[0].mxu0
    %877 = vdwg.mxu0
    %878 = vmatprep.subr.mxu0 0.0
    %v879 = vand.u32 %v53, 4294901760
    %v880 = vsub.f32 %v53, %v879
    %881 = vmatpush1.msra.mxu0 %v880
    %882 = vmatprep.subr.mxu0 0.0
    %883 = vmatpush1.msra.mxu0 0.0
    %884 = vmatprep.subr.mxu0 0.0
    %885 = vmatpush1.msra.mxu0 0.0
    %886 = vmatprep.subr.mxu0 0.0
    %887 = vmatpush1.msra.mxu0 0.0
    %888 = vmatprep.subr.mxu0 0.0
    %889 = vmatpush1.msra.mxu0 0.0
    %890 = vmatprep.subr.mxu0 0.0
    %891 = vmatpush1.msra.mxu0 0.0
    %892 = vmatprep.subr.mxu0 0.0
    %893 = vmatpush1.msra.mxu0 0.0
    %894 = vmatprep.subr.mxu0 0.0
    %895 = vmatpush1.msra.mxu0 0.0
    %896 = vmatprep.subr.mxu0 0.0
    %897 = vmatpush1.msra.mxu0 0.0
    %898 = vmatprep.subr.mxu0 0.0
    %899 = vmatpush1.msra.mxu0 0.0
    %900 = vmatprep.subr.mxu0 0.0
    %901 = vmatpush1.msra.mxu0 0.0
    %902 = vmatprep.subr.mxu0 0.0
    %903 = vmatpush1.msra.mxu0 0.0
    %904 = vmatprep.subr.mxu0 0.0
    %905 = vmatpush1.msra.mxu0 0.0
    %906 = vmatprep.subr.mxu0 0.0
    %907 = vmatpush1.msra.mxu0 0.0
    %908 = vmatprep.subr.mxu0 0.0
    %909 = vmatpush1.msra.mxu0 0.0
    %910 = vmatprep.subr.mxu0 0.0
    %911 = vmatpush1.msra.mxu0 0.0
    %912 = vmatprep.subr.mxu0 0.0
    %913 = vmatpush1.msra.mxu0 0.0
    %914 = vmatprep.subr.mxu0 0.0
    %915 = vmatpush1.msra.mxu0 0.0
    %916 = vmatprep.subr.mxu0 0.0
    %917 = vmatpush1.msra.mxu0 0.0
    %918 = vmatprep.subr.mxu0 0.0
    %919 = vmatpush1.msra.mxu0 0.0
    %920 = vmatprep.subr.mxu0 0.0
    %921 = vmatpush1.msra.mxu0 0.0
    %922 = vmatprep.subr.mxu0 0.0
    %923 = vmatpush1.msra.mxu0 0.0
    %924 = vmatprep.subr.mxu0 0.0
    %925 = vmatpush1.msra.mxu0 0.0
    %926 = vmatprep.subr.mxu0 0.0
    %927 = vmatpush1.msra.mxu0 0.0
    %928 = vmatprep.subr.mxu0 0.0
    %929 = vmatpush1.msra.mxu0 0.0
    %930 = vmatprep.subr.mxu0 0.0
    %931 = vmatpush1.msra.mxu0 0.0
    %932 = vmatprep.subr.mxu0 0.0
    %933 = vmatpush1.msra.mxu0 0.0
    %934 = vmatprep.subr.mxu0 0.0
    %935 = vmatpush1.msra.mxu0 0.0
    %936 = vmatprep.subr.mxu0 0.0
    %937 = vmatpush1.msra.mxu0 0.0
    %938 = vmatprep.subr.mxu0 0.0
    %939 = vmatpush1.msra.mxu0 0.0
    %940 = vmatprep.subr.mxu0 0.0
    %941 = vmatpush1.msra.mxu0 0.0
    %942 = vmatprep.subr.mxu0 0.0
    %943 = vmatpush1.msra.mxu0 0.0
    %944 = vmatprep.mubr.f32.mxu0 0.0
    %v945 = vand.u32 %v724, 4294901760
    %v946 = vsub.f32 %v724, %v945
    %947 = vmatmul.mubr.f32.gmra.mrb[0].mxu0 %v946
    %v948 = vpop.f32.mrb[0].mxu0
    %v949 = vadd.f32 %v875, %v948
    %v950 = vpop.f32.mrb[0].mxu0
    %951 = vdwg.mxu0
    %952 = vmatprep.subr.mxu0 0.0
    %v953 = vand.u32 %v53, 4294901760
    %954 = vmatpush1.msra.mxu0 %v953
    %955 = vmatprep.subr.mxu0 0.0
    %956 = vmatpush1.msra.mxu0 0.0
    %957 = vmatprep.subr.mxu0 0.0
    %958 = vmatpush1.msra.mxu0 0.0
    %959 = vmatprep.subr.mxu0 0.0
    %960 = vmatpush1.msra.mxu0 0.0
    %961 = vmatprep.subr.mxu0 0.0
    %962 = vmatpush1.msra.mxu0 0.0
    %963 = vmatprep.subr.mxu0 0.0
    %964 = vmatpush1.msra.mxu0 0.0
    %965 = vmatprep.subr.mxu0 0.0
    %966 = vmatpush1.msra.mxu0 0.0
    %967 = vmatprep.subr.mxu0 0.0
    %968 = vmatpush1.msra.mxu0 0.0
    %969 = vmatprep.subr.mxu0 0.0
    %970 = vmatpush1.msra.mxu0 0.0
    %971 = vmatprep.subr.mxu0 0.0
    %972 = vmatpush1.msra.mxu0 0.0
    %973 = vmatprep.subr.mxu0 0.0
    %974 = vmatpush1.msra.mxu0 0.0
    %975 = vmatprep.subr.mxu0 0.0
    %976 = vmatpush1.msra.mxu0 0.0
    %977 = vmatprep.subr.mxu0 0.0
    %978 = vmatpush1.msra.mxu0 0.0
    %979 = vmatprep.subr.mxu0 0.0
    %980 = vmatpush1.msra.mxu0 0.0
    %981 = vmatprep.subr.mxu0 0.0
    %982 = vmatpush1.msra.mxu0 0.0
    %983 = vmatprep.subr.mxu0 0.0
    %984 = vmatpush1.msra.mxu0 0.0
    %985 = vmatprep.subr.mxu0 0.0
    %986 = vmatpush1.msra.mxu0 0.0
    %987 = vmatprep.subr.mxu0 0.0
    %988 = vmatpush1.msra.mxu0 0.0
    %989 = vmatprep.subr.mxu0 0.0
    %990 = vmatpush1.msra.mxu0 0.0
    %991 = vmatprep.subr.mxu0 0.0
    %992 = vmatpush1.msra.mxu0 0.0
    %993 = vmatprep.subr.mxu0 0.0
    %994 = vmatpush1.msra.mxu0 0.0
    %995 = vmatprep.subr.mxu0 0.0
    %996 = vmatpush1.msra.mxu0 0.0
    %997 = vmatprep.subr.mxu0 0.0
    %998 = vmatpush1.msra.mxu0 0.0
    %999 = vmatprep.subr.mxu0 0.0
    %1000 = vmatpush1.msra.mxu0 0.0
    %1001 = vmatprep.subr.mxu0 0.0
    %1002 = vmatpush1.msra.mxu0 0.0
    %1003 = vmatprep.subr.mxu0 0.0
    %1004 = vmatpush1.msra.mxu0 0.0
    %1005 = vmatprep.subr.mxu0 0.0
    %1006 = vmatpush1.msra.mxu0 0.0
    %1007 = vmatprep.subr.mxu0 0.0
    %1008 = vmatpush1.msra.mxu0 0.0
    %1009 = vmatprep.subr.mxu0 0.0
    %1010 = vmatpush1.msra.mxu0 0.0
    %1011 = vmatprep.subr.mxu0 0.0
    %1012 = vmatpush1.msra.mxu0 0.0
    %1013 = vmatprep.subr.mxu0 0.0
    %1014 = vmatpush1.msra.mxu0 0.0
    %1015 = vmatprep.subr.mxu0 0.0
    %1016 = vmatpush1.msra.mxu0 0.0
    %1017 = vmatprep.mubr.f32.mxu0 0.0
    %v1018 = vand.u32 %v724, 4294901760
    %v1019 = vsub.f32 %v724, %v1018
    %v1020 = vand.u32 %v1019, 4294901760
    %1021 = vmatmul.mubr.f32.gmra.mrb[0].mxu0 %v1020
    %v1022 = vpop.f32.mrb[0].mxu0
    %v1023 = vadd.f32 %v949, %v1022
    %v1024 = vpop.f32.mrb[0].mxu0
    %1025 = vdwg.mxu0
    %1026 = vmatprep.subr.mxu0 0.0
    %v1027 = vand.u32 %v53, 4294901760
    %v1028 = vsub.f32 %v53, %v1027
    %v1029 = vand.u32 %v1028, 4294901760
    %1030 = vmatpush1.msra.mxu0 %v1029
    %1031 = vmatprep.subr.mxu0 0.0
    %1032 = vmatpush1.msra.mxu0 0.0
    %1033 = vmatprep.subr.mxu0 0.0
    %1034 = vmatpush1.msra.mxu0 0.0
    %1035 = vmatprep.subr.mxu0 0.0
    %1036 = vmatpush1.msra.mxu0 0.0
    %1037 = vmatprep.subr.mxu0 0.0
    %1038 = vmatpush1.msra.mxu0 0.0
    %1039 = vmatprep.subr.mxu0 0.0
    %1040 = vmatpush1.msra.mxu0 0.0
    %1041 = vmatprep.subr.mxu0 0.0
    %1042 = vmatpush1.msra.mxu0 0.0
    %1043 = vmatprep.subr.mxu0 0.0
    %1044 = vmatpush1.msra.mxu0 0.0
    %1045 = vmatprep.subr.mxu0 0.0
    %1046 = vmatpush1.msra.mxu0 0.0
    %1047 = vmatprep.subr.mxu0 0.0
    %1048 = vmatpush1.msra.mxu0 0.0
    %1049 = vmatprep.subr.mxu0 0.0
    %1050 = vmatpush1.msra.mxu0 0.0
    %1051 = vmatprep.subr.mxu0 0.0
    %1052 = vmatpush1.msra.mxu0 0.0
    %1053 = vmatprep.subr.mxu0 0.0
    %1054 = vmatpush1.msra.mxu0 0.0
    %1055 = vmatprep.subr.mxu0 0.0
    %1056 = vmatpush1.msra.mxu0 0.0
    %1057 = vmatprep.subr.mxu0 0.0
    %1058 = vmatpush1.msra.mxu0 0.0
    %1059 = vmatprep.subr.mxu0 0.0
    %1060 = vmatpush1.msra.mxu0 0.0
    %1061 = vmatprep.subr.mxu0 0.0
    %1062 = vmatpush1.msra.mxu0 0.0
    %1063 = vmatprep.subr.mxu0 0.0
    %1064 = vmatpush1.msra.mxu0 0.0
    %1065 = vmatprep.subr.mxu0 0.0
    %1066 = vmatpush1.msra.mxu0 0.0
    %1067 = vmatprep.subr.mxu0 0.0
    %1068 = vmatpush1.msra.mxu0 0.0
    %1069 = vmatprep.subr.mxu0 0.0
    %1070 = vmatpush1.msra.mxu0 0.0
    %1071 = vmatprep.subr.mxu0 0.0
    %1072 = vmatpush1.msra.mxu0 0.0
    %1073 = vmatprep.subr.mxu0 0.0
    %1074 = vmatpush1.msra.mxu0 0.0
    %1075 = vmatprep.subr.mxu0 0.0
    %1076 = vmatpush1.msra.mxu0 0.0
    %1077 = vmatprep.subr.mxu0 0.0
    %1078 = vmatpush1.msra.mxu0 0.0
    %1079 = vmatprep.subr.mxu0 0.0
    %1080 = vmatpush1.msra.mxu0 0.0
    %1081 = vmatprep.subr.mxu0 0.0
    %1082 = vmatpush1.msra.mxu0 0.0
    %1083 = vmatprep.subr.mxu0 0.0
    %1084 = vmatpush1.msra.mxu0 0.0
    %1085 = vmatprep.subr.mxu0 0.0
    %1086 = vmatpush1.msra.mxu0 0.0
    %1087 = vmatprep.subr.mxu0 0.0
    %1088 = vmatpush1.msra.mxu0 0.0
    %1089 = vmatprep.subr.mxu0 0.0
    %1090 = vmatpush1.msra.mxu0 0.0
    %1091 = vmatprep.subr.mxu0 0.0
    %1092 = vmatpush1.msra.mxu0 0.0
    %1093 = vmatprep.mubr.f32.mxu0 0.0
    %v1094 = vand.u32 %v724, 4294901760
    %1095 = vmatmul.mubr.f32.gmra.mrb[0].mxu0 %v1094
    %v1096 = vpop.f32.mrb[0].mxu0
    %v1097 = vadd.f32 %v1023, %v1096
    %v1098 = vpop.f32.mrb[0].mxu0
    %1099 = vdwg.mxu0
    %1100 = vmatprep.subr.mxu0 0.0
    %v1101 = vand.u32 %v53, 4294901760
    %1102 = vmatpush1.msra.mxu0 %v1101
    %1103 = vmatprep.subr.mxu0 0.0
    %1104 = vmatpush1.msra.mxu0 0.0
    %1105 = vmatprep.subr.mxu0 0.0
    %1106 = vmatpush1.msra.mxu0 0.0
    %1107 = vmatprep.subr.mxu0 0.0
    %1108 = vmatpush1.msra.mxu0 0.0
    %1109 = vmatprep.subr.mxu0 0.0
    %1110 = vmatpush1.msra.mxu0 0.0
    %1111 = vmatprep.subr.mxu0 0.0
    %1112 = vmatpush1.msra.mxu0 0.0
    %1113 = vmatprep.subr.mxu0 0.0
    %1114 = vmatpush1.msra.mxu0 0.0
    %1115 = vmatprep.subr.mxu0 0.0
    %1116 = vmatpush1.msra.mxu0 0.0
    %1117 = vmatprep.subr.mxu0 0.0
    %1118 = vmatpush1.msra.mxu0 0.0
    %1119 = vmatprep.subr.mxu0 0.0
    %1120 = vmatpush1.msra.mxu0 0.0
    %1121 = vmatprep.subr.mxu0 0.0
    %1122 = vmatpush1.msra.mxu0 0.0
    %1123 = vmatprep.subr.mxu0 0.0
    %1124 = vmatpush1.msra.mxu0 0.0
    %1125 = vmatprep.subr.mxu0 0.0
    %1126 = vmatpush1.msra.mxu0 0.0
    %1127 = vmatprep.subr.mxu0 0.0
    %1128 = vmatpush1.msra.mxu0 0.0
    %1129 = vmatprep.subr.mxu0 0.0
    %1130 = vmatpush1.msra.mxu0 0.0
    %1131 = vmatprep.subr.mxu0 0.0
    %1132 = vmatpush1.msra.mxu0 0.0
    %1133 = vmatprep.subr.mxu0 0.0
    %1134 = vmatpush1.msra.mxu0 0.0
    %1135 = vmatprep.subr.mxu0 0.0
    %1136 = vmatpush1.msra.mxu0 0.0
    %1137 = vmatprep.subr.mxu0 0.0
    %1138 = vmatpush1.msra.mxu0 0.0
    %1139 = vmatprep.subr.mxu0 0.0
    %1140 = vmatpush1.msra.mxu0 0.0
    %1141 = vmatprep.subr.mxu0 0.0
    %1142 = vmatpush1.msra.mxu0 0.0
    %1143 = vmatprep.subr.mxu0 0.0
    %1144 = vmatpush1.msra.mxu0 0.0
    %1145 = vmatprep.subr.mxu0 0.0
    %1146 = vmatpush1.msra.mxu0 0.0
    %1147 = vmatprep.subr.mxu0 0.0
    %1148 = vmatpush1.msra.mxu0 0.0
    %1149 = vmatprep.subr.mxu0 0.0
    %1150 = vmatpush1.msra.mxu0 0.0
    %1151 = vmatprep.subr.mxu0 0.0
    %1152 = vmatpush1.msra.mxu0 0.0
    %1153 = vmatprep.subr.mxu0 0.0
    %1154 = vmatpush1.msra.mxu0 0.0
    %1155 = vmatprep.subr.mxu0 0.0
    %1156 = vmatpush1.msra.mxu0 0.0
    %1157 = vmatprep.subr.mxu0 0.0
    %1158 = vmatpush1.msra.mxu0 0.0
    %1159 = vmatprep.subr.mxu0 0.0
    %1160 = vmatpush1.msra.mxu0 0.0
    %1161 = vmatprep.subr.mxu0 0.0
    %1162 = vmatpush1.msra.mxu0 0.0
    %1163 = vmatprep.subr.mxu0 0.0
    %1164 = vmatpush1.msra.mxu0 0.0
    %1165 = vmatprep.mubr.f32.mxu0 0.0
    %v1166 = vand.u32 %v724, 4294901760
    %1167 = vmatmul.mubr.f32.gmra.mrb[0].mxu0 %v1166
    %v1168 = vpop.f32.mrb[0].mxu0
    %v1169 = vadd.f32 %v1097, %v1168
    %v1170 = vpop.f32.mrb[0].mxu0
    %1171 = vdwg.mxu0
    %1173 = vset.pattern.permute.xlu0 0
    %1174 = vperm.xlu0 %1173, %v714
    %v1175 = vpop.permute.xlu0 %1174
    %v1176 = vlaneseq
    %v1177 = vshrl.u32 %v1176, 7
    %v1178 = vsub.s32 %v625, %v1177
    %v1179 = vrot.slane %v1175, %v1178
    %v1180 = vsel %vm723, %v1179, 0
    %1182 = vmatprep.subr.mxu0 0.0
    %v1183 = vand.u32 %v54, 4294901760
    %1184 = vmatpush1.msra.mxu0 %v1183
    %1185 = vmatprep.subr.mxu0 0.0
    %1186 = vmatpush1.msra.mxu0 0.0
    %1187 = vmatprep.subr.mxu0 0.0
    %1188 = vmatpush1.msra.mxu0 0.0
    %1189 = vmatprep.subr.mxu0 0.0
    %1190 = vmatpush1.msra.mxu0 0.0
    %1191 = vmatprep.subr.mxu0 0.0
    %1192 = vmatpush1.msra.mxu0 0.0
    %1193 = vmatprep.subr.mxu0 0.0
    %1194 = vmatpush1.msra.mxu0 0.0
    %1195 = vmatprep.subr.mxu0 0.0
    %1196 = vmatpush1.msra.mxu0 0.0
    %1197 = vmatprep.subr.mxu0 0.0
    %1198 = vmatpush1.msra.mxu0 0.0
    %1199 = vmatprep.subr.mxu0 0.0
    %1200 = vmatpush1.msra.mxu0 0.0
    %1201 = vmatprep.subr.mxu0 0.0
    %1202 = vmatpush1.msra.mxu0 0.0
    %1203 = vmatprep.subr.mxu0 0.0
    %1204 = vmatpush1.msra.mxu0 0.0
    %1205 = vmatprep.subr.mxu0 0.0
    %1206 = vmatpush1.msra.mxu0 0.0
    %1207 = vmatprep.subr.mxu0 0.0
    %1208 = vmatpush1.msra.mxu0 0.0
    %1209 = vmatprep.subr.mxu0 0.0
    %1210 = vmatpush1.msra.mxu0 0.0
    %1211 = vmatprep.subr.mxu0 0.0
    %1212 = vmatpush1.msra.mxu0 0.0
    %1213 = vmatprep.subr.mxu0 0.0
    %1214 = vmatpush1.msra.mxu0 0.0
    %1215 = vmatprep.subr.mxu0 0.0
    %1216 = vmatpush1.msra.mxu0 0.0
    %1217 = vmatprep.subr.mxu0 0.0
    %1218 = vmatpush1.msra.mxu0 0.0
    %1219 = vmatprep.subr.mxu0 0.0
    %1220 = vmatpush1.msra.mxu0 0.0
    %1221 = vmatprep.subr.mxu0 0.0
    %1222 = vmatpush1.msra.mxu0 0.0
    %1223 = vmatprep.subr.mxu0 0.0
    %1224 = vmatpush1.msra.mxu0 0.0
    %1225 = vmatprep.subr.mxu0 0.0
    %1226 = vmatpush1.msra.mxu0 0.0
    %1227 = vmatprep.subr.mxu0 0.0
    %1228 = vmatpush1.msra.mxu0 0.0
    %1229 = vmatprep.subr.mxu0 0.0
    %1230 = vmatpush1.msra.mxu0 0.0
    %1231 = vmatprep.subr.mxu0 0.0
    %1232 = vmatpush1.msra.mxu0 0.0
    %1233 = vmatprep.subr.mxu0 0.0
    %1234 = vmatpush1.msra.mxu0 0.0
    %1235 = vmatprep.subr.mxu0 0.0
    %1236 = vmatpush1.msra.mxu0 0.0
    %1237 = vmatprep.subr.mxu0 0.0
    %1238 = vmatpush1.msra.mxu0 0.0
    %1239 = vmatprep.subr.mxu0 0.0
    %1240 = vmatpush1.msra.mxu0 0.0
    %1241 = vmatprep.subr.mxu0 0.0
    %1242 = vmatpush1.msra.mxu0 0.0
    %1243 = vmatprep.subr.mxu0 0.0
    %1244 = vmatpush1.msra.mxu0 0.0
    %1245 = vmatprep.subr.mxu0 0.0
    %1246 = vmatpush1.msra.mxu0 0.0
    %1247 = vmatprep.mubr.f32.mxu0 0.0
    %v1248 = vand.u32 %v1180, 4294901760
    %v1249 = vsub.f32 %v1180, %v1248
    %v1250 = vand.u32 %v1249, 4294901760
    %v1251 = vsub.f32 %v1249, %v1250
    %v1252 = vand.u32 %v1251, 4294901760
    %1253 = vmatmul.mubr.f32.gmra.mrb[0].mxu0 %v1252
    %v1254 = vpop.f32.mrb[0].mxu0
    %v1255 = vadd.f32 0.0, %v1254
    %v1256 = vpop.f32.mrb[0].mxu0
    %1257 = vdwg.mxu0
    %1258 = vmatprep.subr.mxu0 0.0
    %v1259 = vand.u32 %v54, 4294901760
    %v1260 = vsub.f32 %v54, %v1259
    %v1261 = vand.u32 %v1260, 4294901760
    %v1262 = vsub.f32 %v1260, %v1261
    %v1263 = vand.u32 %v1262, 4294901760
    %1264 = vmatpush1.msra.mxu0 %v1263
    %1265 = vmatprep.subr.mxu0 0.0
    %1266 = vmatpush1.msra.mxu0 0.0
    %1267 = vmatprep.subr.mxu0 0.0
    %1268 = vmatpush1.msra.mxu0 0.0
    %1269 = vmatprep.subr.mxu0 0.0
    %1270 = vmatpush1.msra.mxu0 0.0
    %1271 = vmatprep.subr.mxu0 0.0
    %1272 = vmatpush1.msra.mxu0 0.0
    %1273 = vmatprep.subr.mxu0 0.0
    %1274 = vmatpush1.msra.mxu0 0.0
    %1275 = vmatprep.subr.mxu0 0.0
    %1276 = vmatpush1.msra.mxu0 0.0
    %1277 = vmatprep.subr.mxu0 0.0
    %1278 = vmatpush1.msra.mxu0 0.0
    %1279 = vmatprep.subr.mxu0 0.0
    %1280 = vmatpush1.msra.mxu0 0.0
    %1281 = vmatprep.subr.mxu0 0.0
    %1282 = vmatpush1.msra.mxu0 0.0
    %1283 = vmatprep.subr.mxu0 0.0
    %1284 = vmatpush1.msra.mxu0 0.0
    %1285 = vmatprep.subr.mxu0 0.0
    %1286 = vmatpush1.msra.mxu0 0.0
    %1287 = vmatprep.subr.mxu0 0.0
    %1288 = vmatpush1.msra.mxu0 0.0
    %1289 = vmatprep.subr.mxu0 0.0
    %1290 = vmatpush1.msra.mxu0 0.0
    %1291 = vmatprep.subr.mxu0 0.0
    %1292 = vmatpush1.msra.mxu0 0.0
    %1293 = vmatprep.subr.mxu0 0.0
    %1294 = vmatpush1.msra.mxu0 0.0
    %1295 = vmatprep.subr.mxu0 0.0
    %1296 = vmatpush1.msra.mxu0 0.0
    %1297 = vmatprep.subr.mxu0 0.0
    %1298 = vmatpush1.msra.mxu0 0.0
    %1299 = vmatprep.subr.mxu0 0.0
    %1300 = vmatpush1.msra.mxu0 0.0
    %1301 = vmatprep.subr.mxu0 0.0
    %1302 = vmatpush1.msra.mxu0 0.0
    %1303 = vmatprep.subr.mxu0 0.0
    %1304 = vmatpush1.msra.mxu0 0.0
    %1305 = vmatprep.subr.mxu0 0.0
    %1306 = vmatpush1.msra.mxu0 0.0
    %1307 = vmatprep.subr.mxu0 0.0
    %1308 = vmatpush1.msra.mxu0 0.0
    %1309 = vmatprep.subr.mxu0 0.0
    %1310 = vmatpush1.msra.mxu0 0.0
    %1311 = vmatprep.subr.mxu0 0.0
    %1312 = vmatpush1.msra.mxu0 0.0
    %1313 = vmatprep.subr.mxu0 0.0
    %1314 = vmatpush1.msra.mxu0 0.0
    %1315 = vmatprep.subr.mxu0 0.0
    %1316 = vmatpush1.msra.mxu0 0.0
    %1317 = vmatprep.subr.mxu0 0.0
    %1318 = vmatpush1.msra.mxu0 0.0
    %1319 = vmatprep.subr.mxu0 0.0
    %1320 = vmatpush1.msra.mxu0 0.0
    %1321 = vmatprep.subr.mxu0 0.0
    %1322 = vmatpush1.msra.mxu0 0.0
    %1323 = vmatprep.subr.mxu0 0.0
    %1324 = vmatpush1.msra.mxu0 0.0
    %1325 = vmatprep.subr.mxu0 0.0
    %1326 = vmatpush1.msra.mxu0 0.0
    %1327 = vmatprep.mubr.f32.mxu0 0.0
    %v1328 = vand.u32 %v1180, 4294901760
    %1329 = vmatmul.mubr.f32.gmra.mrb[0].mxu0 %v1328
    %v1330 = vpop.f32.mrb[0].mxu0
    %v1331 = vadd.f32 %v1255, %v1330
    %v1332 = vpop.f32.mrb[0].mxu0
    %1333 = vdwg.mxu0
    %1334 = vmatprep.subr.mxu0 0.0
    %v1335 = vand.u32 %v54, 4294901760
    %v1336 = vsub.f32 %v54, %v1335
    %1337 = vmatpush1.msra.mxu0 %v1336
    %1338 = vmatprep.subr.mxu0 0.0
    %1339 = vmatpush1.msra.mxu0 0.0
    %1340 = vmatprep.subr.mxu0 0.0
    %1341 = vmatpush1.msra.mxu0 0.0
    %1342 = vmatprep.subr.mxu0 0.0
    %1343 = vmatpush1.msra.mxu0 0.0
    %1344 = vmatprep.subr.mxu0 0.0
    %1345 = vmatpush1.msra.mxu0 0.0
    %1346 = vmatprep.subr.mxu0 0.0
    %1347 = vmatpush1.msra.mxu0 0.0
    %1348 = vmatprep.subr.mxu0 0.0
    %1349 = vmatpush1.msra.mxu0 0.0
    %1350 = vmatprep.subr.mxu0 0.0
    %1351 = vmatpush1.msra.mxu0 0.0
    %1352 = vmatprep.subr.mxu0 0.0
    %1353 = vmatpush1.msra.mxu0 0.0
    %1354 = vmatprep.subr.mxu0 0.0
    %1355 = vmatpush1.msra.mxu0 0.0
    %1356 = vmatprep.subr.mxu0 0.0
    %1357 = vmatpush1.msra.mxu0 0.0
    %1358 = vmatprep.subr.mxu0 0.0
    %1359 = vmatpush1.msra.mxu0 0.0
    %1360 = vmatprep.subr.mxu0 0.0
    %1361 = vmatpush1.msra.mxu0 0.0
    %1362 = vmatprep.subr.mxu0 0.0
    %1363 = vmatpush1.msra.mxu0 0.0
    %1364 = vmatprep.subr.mxu0 0.0
    %1365 = vmatpush1.msra.mxu0 0.0
    %1366 = vmatprep.subr.mxu0 0.0
    %1367 = vmatpush1.msra.mxu0 0.0
    %1368 = vmatprep.subr.mxu0 0.0
    %1369 = vmatpush1.msra.mxu0 0.0
    %1370 = vmatprep.subr.mxu0 0.0
    %1371 = vmatpush1.msra.mxu0 0.0
    %1372 = vmatprep.subr.mxu0 0.0
    %1373 = vmatpush1.msra.mxu0 0.0
    %1374 = vmatprep.subr.mxu0 0.0
    %1375 = vmatpush1.msra.mxu0 0.0
    %1376 = vmatprep.subr.mxu0 0.0
    %1377 = vmatpush1.msra.mxu0 0.0
    %1378 = vmatprep.subr.mxu0 0.0
    %1379 = vmatpush1.msra.mxu0 0.0
    %1380 = vmatprep.subr.mxu0 0.0
    %1381 = vmatpush1.msra.mxu0 0.0
    %1382 = vmatprep.subr.mxu0 0.0
    %1383 = vmatpush1.msra.mxu0 0.0
    %1384 = vmatprep.subr.mxu0 0.0
    %1385 = vmatpush1.msra.mxu0 0.0
    %1386 = vmatprep.subr.mxu0 0.0
    %1387 = vmatpush1.msra.mxu0 0.0
    %1388 = vmatprep.subr.mxu0 0.0
    %1389 = vmatpush1.msra.mxu0 0.0
    %1390 = vmatprep.subr.mxu0 0.0
    %1391 = vmatpush1.msra.mxu0 0.0
    %1392 = vmatprep.subr.mxu0 0.0
    %1393 = vmatpush1.msra.mxu0 0.0
    %1394 = vmatprep.subr.mxu0 0.0
    %1395 = vmatpush1.msra.mxu0 0.0
    %1396 = vmatprep.subr.mxu0 0.0
    %1397 = vmatpush1.msra.mxu0 0.0
    %1398 = vmatprep.subr.mxu0 0.0
    %1399 = vmatpush1.msra.mxu0 0.0
    %1400 = vmatprep.mubr.f32.mxu0 0.0
    %v1401 = vand.u32 %v1180, 4294901760
    %v1402 = vsub.f32 %v1180, %v1401
    %1403 = vmatmul.mubr.f32.gmra.mrb[0].mxu0 %v1402
    %v1404 = vpop.f32.mrb[0].mxu0
    %v1405 = vadd.f32 %v1331, %v1404
    %v1406 = vpop.f32.mrb[0].mxu0
    %1407 = vdwg.mxu0
    %1408 = vmatprep.subr.mxu0 0.0
    %v1409 = vand.u32 %v54, 4294901760
    %1410 = vmatpush1.msra.mxu0 %v1409
    %1411 = vmatprep.subr.mxu0 0.0
    %1412 = vmatpush1.msra.mxu0 0.0
    %1413 = vmatprep.subr.mxu0 0.0
    %1414 = vmatpush1.msra.mxu0 0.0
    %1415 = vmatprep.subr.mxu0 0.0
    %1416 = vmatpush1.msra.mxu0 0.0
    %1417 = vmatprep.subr.mxu0 0.0
    %1418 = vmatpush1.msra.mxu0 0.0
    %1419 = vmatprep.subr.mxu0 0.0
    %1420 = vmatpush1.msra.mxu0 0.0
    %1421 = vmatprep.subr.mxu0 0.0
    %1422 = vmatpush1.msra.mxu0 0.0
    %1423 = vmatprep.subr.mxu0 0.0
    %1424 = vmatpush1.msra.mxu0 0.0
    %1425 = vmatprep.subr.mxu0 0.0
    %1426 = vmatpush1.msra.mxu0 0.0
    %1427 = vmatprep.subr.mxu0 0.0
    %1428 = vmatpush1.msra.mxu0 0.0
    %1429 = vmatprep.subr.mxu0 0.0
    %1430 = vmatpush1.msra.mxu0 0.0
    %1431 = vmatprep.subr.mxu0 0.0
    %1432 = vmatpush1.msra.mxu0 0.0
    %1433 = vmatprep.subr.mxu0 0.0
    %1434 = vmatpush1.msra.mxu0 0.0
    %1435 = vmatprep.subr.mxu0 0.0
    %1436 = vmatpush1.msra.mxu0 0.0
    %1437 = vmatprep.subr.mxu0 0.0
    %1438 = vmatpush1.msra.mxu0 0.0
    %1439 = vmatprep.subr.mxu0 0.0
    %1440 = vmatpush1.msra.mxu0 0.0
    %1441 = vmatprep.subr.mxu0 0.0
    %1442 = vmatpush1.msra.mxu0 0.0
    %1443 = vmatprep.subr.mxu0 0.0
    %1444 = vmatpush1.msra.mxu0 0.0
    %1445 = vmatprep.subr.mxu0 0.0
    %1446 = vmatpush1.msra.mxu0 0.0
    %1447 = vmatprep.subr.mxu0 0.0
    %1448 = vmatpush1.msra.mxu0 0.0
    %1449 = vmatprep.subr.mxu0 0.0
    %1450 = vmatpush1.msra.mxu0 0.0
    %1451 = vmatprep.subr.mxu0 0.0
    %1452 = vmatpush1.msra.mxu0 0.0
    %1453 = vmatprep.subr.mxu0 0.0
    %1454 = vmatpush1.msra.mxu0 0.0
    %1455 = vmatprep.subr.mxu0 0.0
    %1456 = vmatpush1.msra.mxu0 0.0
    %1457 = vmatprep.subr.mxu0 0.0
    %1458 = vmatpush1.msra.mxu0 0.0
    %1459 = vmatprep.subr.mxu0 0.0
    %1460 = vmatpush1.msra.mxu0 0.0
    %1461 = vmatprep.subr.mxu0 0.0
    %1462 = vmatpush1.msra.mxu0 0.0
    %1463 = vmatprep.subr.mxu0 0.0
    %1464 = vmatpush1.msra.mxu0 0.0
    %1465 = vmatprep.subr.mxu0 0.0
    %1466 = vmatpush1.msra.mxu0 0.0
    %1467 = vmatprep.subr.mxu0 0.0
    %1468 = vmatpush1.msra.mxu0 0.0
    %1469 = vmatprep.subr.mxu0 0.0
    %1470 = vmatpush1.msra.mxu0 0.0
    %1471 = vmatprep.subr.mxu0 0.0
    %1472 = vmatpush1.msra.mxu0 0.0
    %1473 = vmatprep.mubr.f32.mxu0 0.0
    %v1474 = vand.u32 %v1180, 4294901760
    %v1475 = vsub.f32 %v1180, %v1474
    %v1476 = vand.u32 %v1475, 4294901760
    %1477 = vmatmul.mubr.f32.gmra.mrb[0].mxu0 %v1476
    %v1478 = vpop.f32.mrb[0].mxu0
    %v1479 = vadd.f32 %v1405, %v1478
    %v1480 = vpop.f32.mrb[0].mxu0
    %1481 = vdwg.mxu0
    %1482 = vmatprep.subr.mxu0 0.0
    %v1483 = vand.u32 %v54, 4294901760
    %v1484 = vsub.f32 %v54, %v1483
    %v1485 = vand.u32 %v1484, 4294901760
    %1486 = vmatpush1.msra.mxu0 %v1485
    %1487 = vmatprep.subr.mxu0 0.0
    %1488 = vmatpush1.msra.mxu0 0.0
    %1489 = vmatprep.subr.mxu0 0.0
    %1490 = vmatpush1.msra.mxu0 0.0
    %1491 = vmatprep.subr.mxu0 0.0
    %1492 = vmatpush1.msra.mxu0 0.0
    %1493 = vmatprep.subr.mxu0 0.0
    %1494 = vmatpush1.msra.mxu0 0.0
    %1495 = vmatprep.subr.mxu0 0.0
    %1496 = vmatpush1.msra.mxu0 0.0
    %1497 = vmatprep.subr.mxu0 0.0
    %1498 = vmatpush1.msra.mxu0 0.0
    %1499 = vmatprep.subr.mxu0 0.0
    %1500 = vmatpush1.msra.mxu0 0.0
    %1501 = vmatprep.subr.mxu0 0.0
    %1502 = vmatpush1.msra.mxu0 0.0
    %1503 = vmatprep.subr.mxu0 0.0
    %1504 = vmatpush1.msra.mxu0 0.0
    %1505 = vmatprep.subr.mxu0 0.0
    %1506 = vmatpush1.msra.mxu0 0.0
    %1507 = vmatprep.subr.mxu0 0.0
    %1508 = vmatpush1.msra.mxu0 0.0
    %1509 = vmatprep.subr.mxu0 0.0
    %1510 = vmatpush1.msra.mxu0 0.0
    %1511 = vmatprep.subr.mxu0 0.0
    %1512 = vmatpush1.msra.mxu0 0.0
    %1513 = vmatprep.subr.mxu0 0.0
    %1514 = vmatpush1.msra.mxu0 0.0
    %1515 = vmatprep.subr.mxu0 0.0
    %1516 = vmatpush1.msra.mxu0 0.0
    %1517 = vmatprep.subr.mxu0 0.0
    %1518 = vmatpush1.msra.mxu0 0.0
    %1519 = vmatprep.subr.mxu0 0.0
    %1520 = vmatpush1.msra.mxu0 0.0
    %1521 = vmatprep.subr.mxu0 0.0
    %1522 = vmatpush1.msra.mxu0 0.0
    %1523 = vmatprep.subr.mxu0 0.0
    %1524 = vmatpush1.msra.mxu0 0.0
    %1525 = vmatprep.subr.mxu0 0.0
    %1526 = vmatpush1.msra.mxu0 0.0
    %1527 = vmatprep.subr.mxu0 0.0
    %1528 = vmatpush1.msra.mxu0 0.0
    %1529 = vmatprep.subr.mxu0 0.0
    %1530 = vmatpush1.msra.mxu0 0.0
    %1531 = vmatprep.subr.mxu0 0.0
    %1532 = vmatpush1.msra.mxu0 0.0
    %1533 = vmatprep.subr.mxu0 0.0
    %1534 = vmatpush1.msra.mxu0 0.0
    %1535 = vmatprep.subr.mxu0 0.0
    %1536 = vmatpush1.msra.mxu0 0.0
    %1537 = vmatprep.subr.mxu0 0.0
    %1538 = vmatpush1.msra.mxu0 0.0
    %1539 = vmatprep.subr.mxu0 0.0
    %1540 = vmatpush1.msra.mxu0 0.0
    %1541 = vmatprep.subr.mxu0 0.0
    %1542 = vmatpush1.msra.mxu0 0.0
    %1543 = vmatprep.subr.mxu0 0.0
    %1544 = vmatpush1.msra.mxu0 0.0
    %1545 = vmatprep.subr.mxu0 0.0
    %1546 = vmatpush1.msra.mxu0 0.0
    %1547 = vmatprep.subr.mxu0 0.0
    %1548 = vmatpush1.msra.mxu0 0.0
    %1549 = vmatprep.mubr.f32.mxu0 0.0
    %v1550 = vand.u32 %v1180, 4294901760
    %1551 = vmatmul.mubr.f32.gmra.mrb[0].mxu0 %v1550
    %v1552 = vpop.f32.mrb[0].mxu0
    %v1553 = vadd.f32 %v1479, %v1552
    %v1554 = vpop.f32.mrb[0].mxu0
    %1555 = vdwg.mxu0
    %1556 = vmatprep.subr.mxu0 0.0
    %v1557 = vand.u32 %v54, 4294901760
    %1558 = vmatpush1.msra.mxu0 %v1557
    %1559 = vmatprep.subr.mxu0 0.0
    %1560 = vmatpush1.msra.mxu0 0.0
    %1561 = vmatprep.subr.mxu0 0.0
    %1562 = vmatpush1.msra.mxu0 0.0
    %1563 = vmatprep.subr.mxu0 0.0
    %1564 = vmatpush1.msra.mxu0 0.0
    %1565 = vmatprep.subr.mxu0 0.0
    %1566 = vmatpush1.msra.mxu0 0.0
    %1567 = vmatprep.subr.mxu0 0.0
    %1568 = vmatpush1.msra.mxu0 0.0
    %1569 = vmatprep.subr.mxu0 0.0
    %1570 = vmatpush1.msra.mxu0 0.0
    %1571 = vmatprep.subr.mxu0 0.0
    %1572 = vmatpush1.msra.mxu0 0.0
    %1573 = vmatprep.subr.mxu0 0.0
    %1574 = vmatpush1.msra.mxu0 0.0
    %1575 = vmatprep.subr.mxu0 0.0
    %1576 = vmatpush1.msra.mxu0 0.0
    %1577 = vmatprep.subr.mxu0 0.0
    %1578 = vmatpush1.msra.mxu0 0.0
    %1579 = vmatprep.subr.mxu0 0.0
    %1580 = vmatpush1.msra.mxu0 0.0
    %1581 = vmatprep.subr.mxu0 0.0
    %1582 = vmatpush1.msra.mxu0 0.0
    %1583 = vmatprep.subr.mxu0 0.0
    %1584 = vmatpush1.msra.mxu0 0.0
    %1585 = vmatprep.subr.mxu0 0.0
    %1586 = vmatpush1.msra.mxu0 0.0
    %1587 = vmatprep.subr.mxu0 0.0
    %1588 = vmatpush1.msra.mxu0 0.0
    %1589 = vmatprep.subr.mxu0 0.0
    %1590 = vmatpush1.msra.mxu0 0.0
    %1591 = vmatprep.subr.mxu0 0.0
    %1592 = vmatpush1.msra.mxu0 0.0
    %1593 = vmatprep.subr.mxu0 0.0
    %1594 = vmatpush1.msra.mxu0 0.0
    %1595 = vmatprep.subr.mxu0 0.0
    %1596 = vmatpush1.msra.mxu0 0.0
    %1597 = vmatprep.subr.mxu0 0.0
    %1598 = vmatpush1.msra.mxu0 0.0
    %1599 = vmatprep.subr.mxu0 0.0
    %1600 = vmatpush1.msra.mxu0 0.0
    %1601 = vmatprep.subr.mxu0 0.0
    %1602 = vmatpush1.msra.mxu0 0.0
    %1603 = vmatprep.subr.mxu0 0.0
    %1604 = vmatpush1.msra.mxu0 0.0
    %1605 = vmatprep.subr.mxu0 0.0
    %1606 = vmatpush1.msra.mxu0 0.0
    %1607 = vmatprep.subr.mxu0 0.0
    %1608 = vmatpush1.msra.mxu0 0.0
    %1609 = vmatprep.subr.mxu0 0.0
    %1610 = vmatpush1.msra.mxu0 0.0
    %1611 = vmatprep.subr.mxu0 0.0
    %1612 = vmatpush1.msra.mxu0 0.0
    %1613 = vmatprep.subr.mxu0 0.0
    %1614 = vmatpush1.msra.mxu0 0.0
    %1615 = vmatprep.subr.mxu0 0.0
    %1616 = vmatpush1.msra.mxu0 0.0
    %1617 = vmatprep.subr.mxu0 0.0
    %1618 = vmatpush1.msra.mxu0 0.0
    %1619 = vmatprep.subr.mxu0 0.0
    %1620 = vmatpush1.msra.mxu0 0.0
    %1621 = vmatprep.mubr.f32.mxu0 0.0
    %v1622 = vand.u32 %v1180, 4294901760
    %1623 = vmatmul.mubr.f32.gmra.mrb[0].mxu0 %v1622
    %v1624 = vpop.f32.mrb[0].mxu0
    %v1625 = vadd.f32 %v1553, %v1624
    %v1626 = vpop.f32.mrb[0].mxu0
    %1627 = vdwg.mxu0
    %v1630 = vrot.slane %v1625, 7
    %v1631 = vsel %vm634, %v1630, %v1169
    %vm1633 = vcmask 254976
    %1634 = vst.msk [vmem:[#allocation8] sm:$0x3] %vm1633, %v1631
    // Predicated region
    $region34: #{tpu_custom_call.1} parent=1 // pred_check
      _
    $region35: #{tpu_custom_call.1} parent=1 // pred_check_branch
      %1636 = sbr.rel (0) target = $region37
    $region36: #{tpu_custom_call.1} parent=1 // pred_region
      %s1638 = ssub.s32 32, 32
      %1639 = vsyncadd [#allocation5], %s1638
      %s1641 = sshll.u32 [#allocation8], 4
      %s1642 = int_to_ptr.vmem [resolvable:$true] %s1641
      %1644 = dma.vmem_to_hbm [thread:$0]  %s1642, 32, %s6, [#allocation5]
    $region37: #{tpu_custom_call.1} parent=1 // pred_fallthru
      _
    // Predicated region
    $region38: #{tpu_custom_call.1} parent=1 // pred_check
      _
    $region39: #{tpu_custom_call.1} parent=1 // pred_check_branch
      %1646 = sbr.rel (0) target = $region41
    $region40: #{tpu_custom_call.1} parent=1 // pred_region
      %1647 = dma.done [#allocation5], 32
    $region41: #{tpu_custom_call.1} parent=1 // pred_fallthru
      _
    %1648 = vsyncpa [#allocation4], 1
    %1649 = vsyncpa [#allocation7], 1
    %1650 = vsyncpa [#allocation5], 1

</llo_original>
